<compile_context>
chip_gen: v7x
topology: tpu7x:2x2x1
jax: 0.10.0
libtpu: 0.0.40
codegen_flags: <defaults>
</compile_context>

<pallas_src>
import numpy as np
import jax
import jax.numpy as jnp
from jax.experimental import pallas as pl
from jax.experimental.pallas import tpu as pltpu


def lstm_kernel(x_ref, wih_ref, bias_ref, whh_ref, wfc_ref, bfc_ref, out_ref):
    """Single invocation: fused input projection + unrolled recurrence + FC.

    x_ref    : (T, B, 1)   VMEM  raw input, time-major (input_size == 1).
    wih_ref  : (1, 4*Hp)   VMEM  packed W_ih column (gate-major, lane-aligned).
    bias_ref : (1, 4*Hp)   VMEM  packed b_ih + b_hh (gate-major, lane-aligned).
    whh_ref  : (Hp, 4*Hp)  VMEM  packed W_hh^T (gate-major blocks of width Hp).
    wfc_ref  : (Hp, 1)     VMEM  padded W_fc^T.
    bfc_ref  : (1, 1)      SMEM  fc bias scalar.
    out_ref  : (B, 1)      VMEM
    """
    T = x_ref.shape[0]
    B = x_ref.shape[1]
    Hp = whh_ref.shape[0]

    # Tiny row operands (4 vregs each) hoisted out of the recurrence.
    wih = wih_ref[...]       # (1, 4*Hp)
    bias = bias_ref[...]     # (1, 4*Hp)

    def step(t, carry):
        h, c = carry
        # Fused input projection: (B,1) * (1,4*Hp) broadcast FMA on the VPU.
        gx = x_ref[t] * wih + bias
        # One MXU matmul per step on the serial critical path (f32 for exact
        # parity with the f32 reference; padded columns of whh are zero).
        gates = gx + jnp.dot(h, whh_ref[...], preferred_element_type=jnp.float32)
        # Lane-aligned gate slices (Hp is a multiple of 128) -> pure vreg views.
        # sigmoid(x) = 0.5*tanh(0.5*x) + 0.5 : single EUP op per gate.
        i_g = 0.5 * jnp.tanh(0.5 * gates[:, 0 * Hp:1 * Hp]) + 0.5
        f_g = 0.5 * jnp.tanh(0.5 * gates[:, 1 * Hp:2 * Hp]) + 0.5
        g_g = jnp.tanh(gates[:, 2 * Hp:3 * Hp])
        o_g = 0.5 * jnp.tanh(0.5 * gates[:, 3 * Hp:4 * Hp]) + 0.5
        c_new = f_g * c + i_g * g_g
        h_new = o_g * jnp.tanh(c_new)
        # Padded lanes stay exactly 0: wih/bias/whh padding is zero so padded
        # gate pre-activations are 0 -> f=0.5, i=0.5, g=0 -> c_pad, h_pad stay 0.
        return h_new, c_new

    h0 = jnp.zeros((B, Hp), jnp.float32)
    c0 = jnp.zeros((B, Hp), jnp.float32)
    h_last, _ = jax.lax.fori_loop(0, T, step, (h0, c0), unroll=True)

    # Final FC on the last hidden state (padded h lanes / wfc rows are zero).
    out_ref[...] = (jnp.dot(h_last, wfc_ref[...],
                            preferred_element_type=jnp.float32)
                    + bfc_ref[0, 0])


def prepack_params(w_ih, w_hh, b_ih, b_hh, w_fc, b_fc):
    """Repack PyTorch-layout weights ONCE (outside the per-call forward)."""
    H = w_hh.shape[1]
    I = w_ih.shape[1]
    assert I == 1, "kernel specializes the module's input_size == 1"
    Hp = ((H + 127) // 128) * 128          # lane-aligned per-gate width
    f32 = jnp.float32

    # W_ih column -> (1, 4*Hp), gate-major, zero-padded lanes.
    wih_row = jnp.pad(w_ih.astype(f32).reshape(4, H),
                      ((0, 0), (0, Hp - H))).reshape(1, 4 * Hp)

    # Fused bias (b_ih + b_hh) -> (1, 4*Hp), zero-padded lanes.
    bias_row = jnp.pad((b_ih + b_hh).astype(f32).reshape(4, H),
                       ((0, 0), (0, Hp - H))).reshape(1, 4 * Hp)

    # W_hh^T with gate-major blocks: whh_p[in, g*Hp + out] = w_hh[g*H + out, in].
    whh = w_hh.astype(f32).reshape(4, H, H)        # (gate, out_h, in_h)
    whh = jnp.transpose(whh, (2, 0, 1))            # (in_h, gate, out_h)
    whh = jnp.pad(whh, ((0, Hp - H), (0, 0), (0, Hp - H)))
    whh_p = whh.reshape(Hp, 4 * Hp)                # (Hp, 4*Hp)

    wfc_p = jnp.pad(w_fc.astype(f32).T, ((0, Hp - H), (0, 0)))     # (Hp, 1)
    bfc = b_fc.astype(f32).reshape(1, 1)                           # (1, 1)
    return wih_row, bias_row, whh_p, wfc_p, bfc


@jax.jit
def lstm_forward(x_bti, wih_row, bias_row, whh_p, wfc_p, bfc):
    """x_bti: (B, T, 1) like PyTorch batch_first. Returns (B, 1) float32."""
    B, T, I = x_bti.shape
    x_tb1 = jnp.transpose(x_bti.astype(jnp.float32), (1, 0, 2))    # (T, B, 1)

    return pl.pallas_call(
        lstm_kernel,
        out_shape=jax.ShapeDtypeStruct((B, 1), jnp.float32),
        in_specs=[
            pl.BlockSpec(memory_space=pltpu.MemorySpace.VMEM),   # x (T, B, 1)
            pl.BlockSpec(memory_space=pltpu.MemorySpace.VMEM),   # W_ih row
            pl.BlockSpec(memory_space=pltpu.MemorySpace.VMEM),   # fused bias row
            pl.BlockSpec(memory_space=pltpu.MemorySpace.VMEM),   # W_hh^T
            pl.BlockSpec(memory_space=pltpu.MemorySpace.VMEM),   # W_fc^T
            pl.BlockSpec(memory_space=pltpu.MemorySpace.SMEM),   # b_fc scalar
        ],
        out_specs=pl.BlockSpec(memory_space=pltpu.MemorySpace.VMEM),
    )(x_tb1, wih_row, bias_row, whh_p, wfc_p, bfc)


def lstm_reference(x_bti, w_ih, w_hh, b_ih, b_hh, w_fc, b_fc):
    """Pure-JAX reference matching torch.nn.LSTM(batch_first=True) + Linear."""
    B, T, I = x_bti.shape
    H = w_hh.shape[1]
    h = jnp.zeros((B, H), jnp.float32)
    c = jnp.zeros((B, H), jnp.float32)

    def step(carry, x_t):
        h, c = carry
        gates = x_t @ w_ih.T + h @ w_hh.T + b_ih + b_hh
        i = jax.nn.sigmoid(gates[:, 0 * H:1 * H])
        f = jax.nn.sigmoid(gates[:, 1 * H:2 * H])
        g = jnp.tanh(gates[:, 2 * H:3 * H])
        o = jax.nn.sigmoid(gates[:, 3 * H:4 * H])
        c = f * c + i * g
        h = o * jnp.tanh(c)
        return (h, c), None

    (h, c), _ = jax.lax.scan(step, (h, c), jnp.transpose(x_bti, (1, 0, 2)))
    return h @ w_fc.T + b_fc


if __name__ == "__main__":
    # Shapes implied by the module: input_size=1, hidden_size=50, num_layers=1.
    B, T, I, H = 2, 8, 1, 50

    key = jax.random.PRNGKey(0)
    k = jax.random.split(key, 8)
    bound = 1.0 / np.sqrt(H)   # PyTorch default uniform init range

    x = jax.random.normal(k[0], (B, T, I), dtype=jnp.float32)
    w_ih = jax.random.uniform(k[1], (4 * H, I), minval=-bound, maxval=bound)
    w_hh = jax.random.uniform(k[2], (4 * H, H), minval=-bound, maxval=bound)
    b_ih = jax.random.uniform(k[3], (4 * H,), minval=-bound, maxval=bound)
    b_hh = jax.random.uniform(k[4], (4 * H,), minval=-bound, maxval=bound)
    w_fc = jax.random.uniform(k[5], (1, H), minval=-bound, maxval=bound)
    b_fc = jax.random.uniform(k[6], (1,), minval=-bound, maxval=bound)

    # One-time weight prepacking (not part of the per-call forward path).
    packed = prepack_params(w_ih, w_hh, b_ih, b_hh, w_fc, b_fc)
    packed = jax.block_until_ready(packed)

    out = lstm_forward(x, *packed)
    out = jax.block_until_ready(out)

    ref = lstm_reference(x, w_ih, w_hh, b_ih, b_hh, w_fc, b_fc)
    assert out.shape == (B, 1)
    np.testing.assert_allclose(np.asarray(out), np.asarray(ref),
                               rtol=1e-4, atol=1e-5)
    print("KERNEL_OK")
</pallas_src>

<mosaic_0001>
module attributes {stable_mosaic.version = 11 : i64} {
  func.func @lstm_kernel(%arg0: memref<8x2x1xf32, #tpu.memory_space<vmem>>, %arg1: memref<1x512xf32, #tpu.memory_space<vmem>>, %arg2: memref<1x512xf32, #tpu.memory_space<vmem>>, %arg3: memref<128x512xf32, #tpu.memory_space<vmem>>, %arg4: memref<128x1xf32, #tpu.memory_space<vmem>>, %arg5: memref<1x1xf32, #tpu.memory_space<smem>>, %arg6: memref<2x1xf32, #tpu.memory_space<vmem>>) attributes {dimension_semantics = [], scalar_prefetch = 0 : i64, scratch_operands = 0 : i64, tpu.core_type = #tpu.core_type<tc>} {
    %c0 = arith.constant 0 : index
    %c0_0 = arith.constant 0 : index
    %0 = vector.load %arg1[%c0, %c0_0] : memref<1x512xf32, #tpu.memory_space<vmem>>, vector<1x512xf32>
    %c0_1 = arith.constant 0 : index
    %c0_2 = arith.constant 0 : index
    %1 = vector.load %arg2[%c0_1, %c0_2] : memref<1x512xf32, #tpu.memory_space<vmem>>, vector<1x512xf32>
    %cst = arith.constant 0.000000e+00 : f32
    %2 = vector.broadcast %cst : f32 to vector<2x128xf32>
    %cst_3 = arith.constant 0.000000e+00 : f32
    %3 = vector.broadcast %cst_3 : f32 to vector<2x128xf32>
    %c0_i32 = arith.constant 0 : i32
    %4 = arith.index_cast %c0_i32 : i32 to index
    %c0_4 = arith.constant 0 : index
    %c0_5 = arith.constant 0 : index
    %5 = vector.load %arg0[%4, %c0_4, %c0_5] : memref<8x2x1xf32, #tpu.memory_space<vmem>>, vector<1x2x1xf32>
    %6 = vector.shape_cast %5 : vector<1x2x1xf32> to vector<2x1xf32>
    %7 = vector.broadcast %6 : vector<2x1xf32> to vector<2x512xf32>
    %8 = vector.broadcast %0 : vector<1x512xf32> to vector<2x512xf32>
    %9 = arith.mulf %7, %8 : vector<2x512xf32>
    %10 = vector.broadcast %1 : vector<1x512xf32> to vector<2x512xf32>
    %11 = arith.addf %9, %10 : vector<2x512xf32>
    %c0_6 = arith.constant 0 : index
    %c0_7 = arith.constant 0 : index
    %12 = vector.load %arg3[%c0_6, %c0_7] : memref<128x512xf32, #tpu.memory_space<vmem>>, vector<128x512xf32>
    %cst_8 = arith.constant dense<0.000000e+00> : vector<2x512xf32>
    %13 = tpu.matmul %2, %12, %cst_8 {dimension_numbers = #tpu.dot_dimension_numbers<[1], [0], [0], [1], [0, 0, 1, 1], [], []>} : vector<2x128xf32>, vector<128x512xf32>, vector<2x512xf32> -> vector<2x512xf32>
    %14 = arith.addf %11, %13 : vector<2x512xf32>
    %15 = vector.extract_strided_slice %14 {offsets = [0, 0], sizes = [2, 128], strides = [1, 1]} : vector<2x512xf32> to vector<2x128xf32>
    %cst_9 = arith.constant 5.000000e-01 : f32
    %16 = vector.broadcast %cst_9 : f32 to vector<2x128xf32>
    %17 = arith.mulf %16, %15 : vector<2x128xf32>
    %18 = math.tanh %17 : vector<2x128xf32>
    %cst_10 = arith.constant 5.000000e-01 : f32
    %19 = vector.broadcast %cst_10 : f32 to vector<2x128xf32>
    %20 = arith.mulf %19, %18 : vector<2x128xf32>
    %cst_11 = arith.constant 5.000000e-01 : f32
    %21 = vector.broadcast %cst_11 : f32 to vector<2x128xf32>
    %22 = arith.addf %20, %21 : vector<2x128xf32>
    %23 = vector.extract_strided_slice %14 {offsets = [0, 128], sizes = [2, 128], strides = [1, 1]} : vector<2x512xf32> to vector<2x128xf32>
    %cst_12 = arith.constant 5.000000e-01 : f32
    %24 = vector.broadcast %cst_12 : f32 to vector<2x128xf32>
    %25 = arith.mulf %24, %23 : vector<2x128xf32>
    %26 = math.tanh %25 : vector<2x128xf32>
    %cst_13 = arith.constant 5.000000e-01 : f32
    %27 = vector.broadcast %cst_13 : f32 to vector<2x128xf32>
    %28 = arith.mulf %27, %26 : vector<2x128xf32>
    %cst_14 = arith.constant 5.000000e-01 : f32
    %29 = vector.broadcast %cst_14 : f32 to vector<2x128xf32>
    %30 = arith.addf %28, %29 : vector<2x128xf32>
    %31 = vector.extract_strided_slice %14 {offsets = [0, 256], sizes = [2, 128], strides = [1, 1]} : vector<2x512xf32> to vector<2x128xf32>
    %32 = math.tanh %31 : vector<2x128xf32>
    %33 = vector.extract_strided_slice %14 {offsets = [0, 384], sizes = [2, 128], strides = [1, 1]} : vector<2x512xf32> to vector<2x128xf32>
    %cst_15 = arith.constant 5.000000e-01 : f32
    %34 = vector.broadcast %cst_15 : f32 to vector<2x128xf32>
    %35 = arith.mulf %34, %33 : vector<2x128xf32>
    %36 = math.tanh %35 : vector<2x128xf32>
    %cst_16 = arith.constant 5.000000e-01 : f32
    %37 = vector.broadcast %cst_16 : f32 to vector<2x128xf32>
    %38 = arith.mulf %37, %36 : vector<2x128xf32>
    %cst_17 = arith.constant 5.000000e-01 : f32
    %39 = vector.broadcast %cst_17 : f32 to vector<2x128xf32>
    %40 = arith.addf %38, %39 : vector<2x128xf32>
    %41 = arith.mulf %30, %3 : vector<2x128xf32>
    %42 = arith.mulf %22, %32 : vector<2x128xf32>
    %43 = arith.addf %41, %42 : vector<2x128xf32>
    %44 = math.tanh %43 : vector<2x128xf32>
    %45 = arith.mulf %40, %44 : vector<2x128xf32>
    %c1_i32 = arith.constant 1 : i32
    %46 = arith.index_cast %c1_i32 : i32 to index
    %c0_18 = arith.constant 0 : index
    %c0_19 = arith.constant 0 : index
    %47 = vector.load %arg0[%46, %c0_18, %c0_19] : memref<8x2x1xf32, #tpu.memory_space<vmem>>, vector<1x2x1xf32>
    %48 = vector.shape_cast %47 : vector<1x2x1xf32> to vector<2x1xf32>
    %49 = vector.broadcast %48 : vector<2x1xf32> to vector<2x512xf32>
    %50 = vector.broadcast %0 : vector<1x512xf32> to vector<2x512xf32>
    %51 = arith.mulf %49, %50 : vector<2x512xf32>
    %52 = vector.broadcast %1 : vector<1x512xf32> to vector<2x512xf32>
    %53 = arith.addf %51, %52 : vector<2x512xf32>
    %c0_20 = arith.constant 0 : index
    %c0_21 = arith.constant 0 : index
    %54 = vector.load %arg3[%c0_20, %c0_21] : memref<128x512xf32, #tpu.memory_space<vmem>>, vector<128x512xf32>
    %cst_22 = arith.constant dense<0.000000e+00> : vector<2x512xf32>
    %55 = tpu.matmul %45, %54, %cst_22 {dimension_numbers = #tpu.dot_dimension_numbers<[1], [0], [0], [1], [0, 0, 1, 1], [], []>} : vector<2x128xf32>, vector<128x512xf32>, vector<2x512xf32> -> vector<2x512xf32>
    %56 = arith.addf %53, %55 : vector<2x512xf32>
    %57 = vector.extract_strided_slice %56 {offsets = [0, 0], sizes = [2, 128], strides = [1, 1]} : vector<2x512xf32> to vector<2x128xf32>
    %cst_23 = arith.constant 5.000000e-01 : f32
    %58 = vector.broadcast %cst_23 : f32 to vector<2x128xf32>
    %59 = arith.mulf %58, %57 : vector<2x128xf32>
    %60 = math.tanh %59 : vector<2x128xf32>
    %cst_24 = arith.constant 5.000000e-01 : f32
    %61 = vector.broadcast %cst_24 : f32 to vector<2x128xf32>
    %62 = arith.mulf %61, %60 : vector<2x128xf32>
    %cst_25 = arith.constant 5.000000e-01 : f32
    %63 = vector.broadcast %cst_25 : f32 to vector<2x128xf32>
    %64 = arith.addf %62, %63 : vector<2x128xf32>
    %65 = vector.extract_strided_slice %56 {offsets = [0, 128], sizes = [2, 128], strides = [1, 1]} : vector<2x512xf32> to vector<2x128xf32>
    %cst_26 = arith.constant 5.000000e-01 : f32
    %66 = vector.broadcast %cst_26 : f32 to vector<2x128xf32>
    %67 = arith.mulf %66, %65 : vector<2x128xf32>
    %68 = math.tanh %67 : vector<2x128xf32>
    %cst_27 = arith.constant 5.000000e-01 : f32
    %69 = vector.broadcast %cst_27 : f32 to vector<2x128xf32>
    %70 = arith.mulf %69, %68 : vector<2x128xf32>
    %cst_28 = arith.constant 5.000000e-01 : f32
    %71 = vector.broadcast %cst_28 : f32 to vector<2x128xf32>
    %72 = arith.addf %70, %71 : vector<2x128xf32>
    %73 = vector.extract_strided_slice %56 {offsets = [0, 256], sizes = [2, 128], strides = [1, 1]} : vector<2x512xf32> to vector<2x128xf32>
    %74 = math.tanh %73 : vector<2x128xf32>
    %75 = vector.extract_strided_slice %56 {offsets = [0, 384], sizes = [2, 128], strides = [1, 1]} : vector<2x512xf32> to vector<2x128xf32>
    %cst_29 = arith.constant 5.000000e-01 : f32
    %76 = vector.broadcast %cst_29 : f32 to vector<2x128xf32>
    %77 = arith.mulf %76, %75 : vector<2x128xf32>
    %78 = math.tanh %77 : vector<2x128xf32>
    %cst_30 = arith.constant 5.000000e-01 : f32
    %79 = vector.broadcast %cst_30 : f32 to vector<2x128xf32>
    %80 = arith.mulf %79, %78 : vector<2x128xf32>
    %cst_31 = arith.constant 5.000000e-01 : f32
    %81 = vector.broadcast %cst_31 : f32 to vector<2x128xf32>
    %82 = arith.addf %80, %81 : vector<2x128xf32>
    %83 = arith.mulf %72, %43 : vector<2x128xf32>
    %84 = arith.mulf %64, %74 : vector<2x128xf32>
    %85 = arith.addf %83, %84 : vector<2x128xf32>
    %86 = math.tanh %85 : vector<2x128xf32>
    %87 = arith.mulf %82, %86 : vector<2x128xf32>
    %c2_i32 = arith.constant 2 : i32
    %88 = arith.index_cast %c2_i32 : i32 to index
    %c0_32 = arith.constant 0 : index
    %c0_33 = arith.constant 0 : index
    %89 = vector.load %arg0[%88, %c0_32, %c0_33] : memref<8x2x1xf32, #tpu.memory_space<vmem>>, vector<1x2x1xf32>
    %90 = vector.shape_cast %89 : vector<1x2x1xf32> to vector<2x1xf32>
    %91 = vector.broadcast %90 : vector<2x1xf32> to vector<2x512xf32>
    %92 = vector.broadcast %0 : vector<1x512xf32> to vector<2x512xf32>
    %93 = arith.mulf %91, %92 : vector<2x512xf32>
    %94 = vector.broadcast %1 : vector<1x512xf32> to vector<2x512xf32>
    %95 = arith.addf %93, %94 : vector<2x512xf32>
    %c0_34 = arith.constant 0 : index
    %c0_35 = arith.constant 0 : index
    %96 = vector.load %arg3[%c0_34, %c0_35] : memref<128x512xf32, #tpu.memory_space<vmem>>, vector<128x512xf32>
    %cst_36 = arith.constant dense<0.000000e+00> : vector<2x512xf32>
    %97 = tpu.matmul %87, %96, %cst_36 {dimension_numbers = #tpu.dot_dimension_numbers<[1], [0], [0], [1], [0, 0, 1, 1], [], []>} : vector<2x128xf32>, vector<128x512xf32>, vector<2x512xf32> -> vector<2x512xf32>
    %98 = arith.addf %95, %97 : vector<2x512xf32>
    %99 = vector.extract_strided_slice %98 {offsets = [0, 0], sizes = [2, 128], strides = [1, 1]} : vector<2x512xf32> to vector<2x128xf32>
    %cst_37 = arith.constant 5.000000e-01 : f32
    %100 = vector.broadcast %cst_37 : f32 to vector<2x128xf32>
    %101 = arith.mulf %100, %99 : vector<2x128xf32>
    %102 = math.tanh %101 : vector<2x128xf32>
    %cst_38 = arith.constant 5.000000e-01 : f32
    %103 = vector.broadcast %cst_38 : f32 to vector<2x128xf32>
    %104 = arith.mulf %103, %102 : vector<2x128xf32>
    %cst_39 = arith.constant 5.000000e-01 : f32
    %105 = vector.broadcast %cst_39 : f32 to vector<2x128xf32>
    %106 = arith.addf %104, %105 : vector<2x128xf32>
    %107 = vector.extract_strided_slice %98 {offsets = [0, 128], sizes = [2, 128], strides = [1, 1]} : vector<2x512xf32> to vector<2x128xf32>
    %cst_40 = arith.constant 5.000000e-01 : f32
    %108 = vector.broadcast %cst_40 : f32 to vector<2x128xf32>
    %109 = arith.mulf %108, %107 : vector<2x128xf32>
    %110 = math.tanh %109 : vector<2x128xf32>
    %cst_41 = arith.constant 5.000000e-01 : f32
    %111 = vector.broadcast %cst_41 : f32 to vector<2x128xf32>
    %112 = arith.mulf %111, %110 : vector<2x128xf32>
    %cst_42 = arith.constant 5.000000e-01 : f32
    %113 = vector.broadcast %cst_42 : f32 to vector<2x128xf32>
    %114 = arith.addf %112, %113 : vector<2x128xf32>
    %115 = vector.extract_strided_slice %98 {offsets = [0, 256], sizes = [2, 128], strides = [1, 1]} : vector<2x512xf32> to vector<2x128xf32>
    %116 = math.tanh %115 : vector<2x128xf32>
    %117 = vector.extract_strided_slice %98 {offsets = [0, 384], sizes = [2, 128], strides = [1, 1]} : vector<2x512xf32> to vector<2x128xf32>
    %cst_43 = arith.constant 5.000000e-01 : f32
    %118 = vector.broadcast %cst_43 : f32 to vector<2x128xf32>
    %119 = arith.mulf %118, %117 : vector<2x128xf32>
    %120 = math.tanh %119 : vector<2x128xf32>
    %cst_44 = arith.constant 5.000000e-01 : f32
    %121 = vector.broadcast %cst_44 : f32 to vector<2x128xf32>
    %122 = arith.mulf %121, %120 : vector<2x128xf32>
    %cst_45 = arith.constant 5.000000e-01 : f32
    %123 = vector.broadcast %cst_45 : f32 to vector<2x128xf32>
    %124 = arith.addf %122, %123 : vector<2x128xf32>
    %125 = arith.mulf %114, %85 : vector<2x128xf32>
    %126 = arith.mulf %106, %116 : vector<2x128xf32>
    %127 = arith.addf %125, %126 : vector<2x128xf32>
    %128 = math.tanh %127 : vector<2x128xf32>
    %129 = arith.mulf %124, %128 : vector<2x128xf32>
    %c3_i32 = arith.constant 3 : i32
    %130 = arith.index_cast %c3_i32 : i32 to index
    %c0_46 = arith.constant 0 : index
    %c0_47 = arith.constant 0 : index
    %131 = vector.load %arg0[%130, %c0_46, %c0_47] : memref<8x2x1xf32, #tpu.memory_space<vmem>>, vector<1x2x1xf32>
    %132 = vector.shape_cast %131 : vector<1x2x1xf32> to vector<2x1xf32>
    %133 = vector.broadcast %132 : vector<2x1xf32> to vector<2x512xf32>
    %134 = vector.broadcast %0 : vector<1x512xf32> to vector<2x512xf32>
    %135 = arith.mulf %133, %134 : vector<2x512xf32>
    %136 = vector.broadcast %1 : vector<1x512xf32> to vector<2x512xf32>
    %137 = arith.addf %135, %136 : vector<2x512xf32>
    %c0_48 = arith.constant 0 : index
    %c0_49 = arith.constant 0 : index
    %138 = vector.load %arg3[%c0_48, %c0_49] : memref<128x512xf32, #tpu.memory_space<vmem>>, vector<128x512xf32>
    %cst_50 = arith.constant dense<0.000000e+00> : vector<2x512xf32>
    %139 = tpu.matmul %129, %138, %cst_50 {dimension_numbers = #tpu.dot_dimension_numbers<[1], [0], [0], [1], [0, 0, 1, 1], [], []>} : vector<2x128xf32>, vector<128x512xf32>, vector<2x512xf32> -> vector<2x512xf32>
    %140 = arith.addf %137, %139 : vector<2x512xf32>
    %141 = vector.extract_strided_slice %140 {offsets = [0, 0], sizes = [2, 128], strides = [1, 1]} : vector<2x512xf32> to vector<2x128xf32>
    %cst_51 = arith.constant 5.000000e-01 : f32
    %142 = vector.broadcast %cst_51 : f32 to vector<2x128xf32>
    %143 = arith.mulf %142, %141 : vector<2x128xf32>
    %144 = math.tanh %143 : vector<2x128xf32>
    %cst_52 = arith.constant 5.000000e-01 : f32
    %145 = vector.broadcast %cst_52 : f32 to vector<2x128xf32>
    %146 = arith.mulf %145, %144 : vector<2x128xf32>
    %cst_53 = arith.constant 5.000000e-01 : f32
    %147 = vector.broadcast %cst_53 : f32 to vector<2x128xf32>
    %148 = arith.addf %146, %147 : vector<2x128xf32>
    %149 = vector.extract_strided_slice %140 {offsets = [0, 128], sizes = [2, 128], strides = [1, 1]} : vector<2x512xf32> to vector<2x128xf32>
    %cst_54 = arith.constant 5.000000e-01 : f32
    %150 = vector.broadcast %cst_54 : f32 to vector<2x128xf32>
    %151 = arith.mulf %150, %149 : vector<2x128xf32>
    %152 = math.tanh %151 : vector<2x128xf32>
    %cst_55 = arith.constant 5.000000e-01 : f32
    %153 = vector.broadcast %cst_55 : f32 to vector<2x128xf32>
    %154 = arith.mulf %153, %152 : vector<2x128xf32>
    %cst_56 = arith.constant 5.000000e-01 : f32
    %155 = vector.broadcast %cst_56 : f32 to vector<2x128xf32>
    %156 = arith.addf %154, %155 : vector<2x128xf32>
    %157 = vector.extract_strided_slice %140 {offsets = [0, 256], sizes = [2, 128], strides = [1, 1]} : vector<2x512xf32> to vector<2x128xf32>
    %158 = math.tanh %157 : vector<2x128xf32>
    %159 = vector.extract_strided_slice %140 {offsets = [0, 384], sizes = [2, 128], strides = [1, 1]} : vector<2x512xf32> to vector<2x128xf32>
    %cst_57 = arith.constant 5.000000e-01 : f32
    %160 = vector.broadcast %cst_57 : f32 to vector<2x128xf32>
    %161 = arith.mulf %160, %159 : vector<2x128xf32>
    %162 = math.tanh %161 : vector<2x128xf32>
    %cst_58 = arith.constant 5.000000e-01 : f32
    %163 = vector.broadcast %cst_58 : f32 to vector<2x128xf32>
    %164 = arith.mulf %163, %162 : vector<2x128xf32>
    %cst_59 = arith.constant 5.000000e-01 : f32
    %165 = vector.broadcast %cst_59 : f32 to vector<2x128xf32>
    %166 = arith.addf %164, %165 : vector<2x128xf32>
    %167 = arith.mulf %156, %127 : vector<2x128xf32>
    %168 = arith.mulf %148, %158 : vector<2x128xf32>
    %169 = arith.addf %167, %168 : vector<2x128xf32>
    %170 = math.tanh %169 : vector<2x128xf32>
    %171 = arith.mulf %166, %170 : vector<2x128xf32>
    %c4_i32 = arith.constant 4 : i32
    %172 = arith.index_cast %c4_i32 : i32 to index
    %c0_60 = arith.constant 0 : index
    %c0_61 = arith.constant 0 : index
    %173 = vector.load %arg0[%172, %c0_60, %c0_61] : memref<8x2x1xf32, #tpu.memory_space<vmem>>, vector<1x2x1xf32>
    %174 = vector.shape_cast %173 : vector<1x2x1xf32> to vector<2x1xf32>
    %175 = vector.broadcast %174 : vector<2x1xf32> to vector<2x512xf32>
    %176 = vector.broadcast %0 : vector<1x512xf32> to vector<2x512xf32>
    %177 = arith.mulf %175, %176 : vector<2x512xf32>
    %178 = vector.broadcast %1 : vector<1x512xf32> to vector<2x512xf32>
    %179 = arith.addf %177, %178 : vector<2x512xf32>
    %c0_62 = arith.constant 0 : index
    %c0_63 = arith.constant 0 : index
    %180 = vector.load %arg3[%c0_62, %c0_63] : memref<128x512xf32, #tpu.memory_space<vmem>>, vector<128x512xf32>
    %cst_64 = arith.constant dense<0.000000e+00> : vector<2x512xf32>
    %181 = tpu.matmul %171, %180, %cst_64 {dimension_numbers = #tpu.dot_dimension_numbers<[1], [0], [0], [1], [0, 0, 1, 1], [], []>} : vector<2x128xf32>, vector<128x512xf32>, vector<2x512xf32> -> vector<2x512xf32>
    %182 = arith.addf %179, %181 : vector<2x512xf32>
    %183 = vector.extract_strided_slice %182 {offsets = [0, 0], sizes = [2, 128], strides = [1, 1]} : vector<2x512xf32> to vector<2x128xf32>
    %cst_65 = arith.constant 5.000000e-01 : f32
    %184 = vector.broadcast %cst_65 : f32 to vector<2x128xf32>
    %185 = arith.mulf %184, %183 : vector<2x128xf32>
    %186 = math.tanh %185 : vector<2x128xf32>
    %cst_66 = arith.constant 5.000000e-01 : f32
    %187 = vector.broadcast %cst_66 : f32 to vector<2x128xf32>
    %188 = arith.mulf %187, %186 : vector<2x128xf32>
    %cst_67 = arith.constant 5.000000e-01 : f32
    %189 = vector.broadcast %cst_67 : f32 to vector<2x128xf32>
    %190 = arith.addf %188, %189 : vector<2x128xf32>
    %191 = vector.extract_strided_slice %182 {offsets = [0, 128], sizes = [2, 128], strides = [1, 1]} : vector<2x512xf32> to vector<2x128xf32>
    %cst_68 = arith.constant 5.000000e-01 : f32
    %192 = vector.broadcast %cst_68 : f32 to vector<2x128xf32>
    %193 = arith.mulf %192, %191 : vector<2x128xf32>
    %194 = math.tanh %193 : vector<2x128xf32>
    %cst_69 = arith.constant 5.000000e-01 : f32
    %195 = vector.broadcast %cst_69 : f32 to vector<2x128xf32>
    %196 = arith.mulf %195, %194 : vector<2x128xf32>
    %cst_70 = arith.constant 5.000000e-01 : f32
    %197 = vector.broadcast %cst_70 : f32 to vector<2x128xf32>
    %198 = arith.addf %196, %197 : vector<2x128xf32>
    %199 = vector.extract_strided_slice %182 {offsets = [0, 256], sizes = [2, 128], strides = [1, 1]} : vector<2x512xf32> to vector<2x128xf32>
    %200 = math.tanh %199 : vector<2x128xf32>
    %201 = vector.extract_strided_slice %182 {offsets = [0, 384], sizes = [2, 128], strides = [1, 1]} : vector<2x512xf32> to vector<2x128xf32>
    %cst_71 = arith.constant 5.000000e-01 : f32
    %202 = vector.broadcast %cst_71 : f32 to vector<2x128xf32>
    %203 = arith.mulf %202, %201 : vector<2x128xf32>
    %204 = math.tanh %203 : vector<2x128xf32>
    %cst_72 = arith.constant 5.000000e-01 : f32
    %205 = vector.broadcast %cst_72 : f32 to vector<2x128xf32>
    %206 = arith.mulf %205, %204 : vector<2x128xf32>
    %cst_73 = arith.constant 5.000000e-01 : f32
    %207 = vector.broadcast %cst_73 : f32 to vector<2x128xf32>
    %208 = arith.addf %206, %207 : vector<2x128xf32>
    %209 = arith.mulf %198, %169 : vector<2x128xf32>
    %210 = arith.mulf %190, %200 : vector<2x128xf32>
    %211 = arith.addf %209, %210 : vector<2x128xf32>
    %212 = math.tanh %211 : vector<2x128xf32>
    %213 = arith.mulf %208, %212 : vector<2x128xf32>
    %c5_i32 = arith.constant 5 : i32
    %214 = arith.index_cast %c5_i32 : i32 to index
    %c0_74 = arith.constant 0 : index
    %c0_75 = arith.constant 0 : index
    %215 = vector.load %arg0[%214, %c0_74, %c0_75] : memref<8x2x1xf32, #tpu.memory_space<vmem>>, vector<1x2x1xf32>
    %216 = vector.shape_cast %215 : vector<1x2x1xf32> to vector<2x1xf32>
    %217 = vector.broadcast %216 : vector<2x1xf32> to vector<2x512xf32>
    %218 = vector.broadcast %0 : vector<1x512xf32> to vector<2x512xf32>
    %219 = arith.mulf %217, %218 : vector<2x512xf32>
    %220 = vector.broadcast %1 : vector<1x512xf32> to vector<2x512xf32>
    %221 = arith.addf %219, %220 : vector<2x512xf32>
    %c0_76 = arith.constant 0 : index
    %c0_77 = arith.constant 0 : index
    %222 = vector.load %arg3[%c0_76, %c0_77] : memref<128x512xf32, #tpu.memory_space<vmem>>, vector<128x512xf32>
    %cst_78 = arith.constant dense<0.000000e+00> : vector<2x512xf32>
    %223 = tpu.matmul %213, %222, %cst_78 {dimension_numbers = #tpu.dot_dimension_numbers<[1], [0], [0], [1], [0, 0, 1, 1], [], []>} : vector<2x128xf32>, vector<128x512xf32>, vector<2x512xf32> -> vector<2x512xf32>
    %224 = arith.addf %221, %223 : vector<2x512xf32>
    %225 = vector.extract_strided_slice %224 {offsets = [0, 0], sizes = [2, 128], strides = [1, 1]} : vector<2x512xf32> to vector<2x128xf32>
    %cst_79 = arith.constant 5.000000e-01 : f32
    %226 = vector.broadcast %cst_79 : f32 to vector<2x128xf32>
    %227 = arith.mulf %226, %225 : vector<2x128xf32>
    %228 = math.tanh %227 : vector<2x128xf32>
    %cst_80 = arith.constant 5.000000e-01 : f32
    %229 = vector.broadcast %cst_80 : f32 to vector<2x128xf32>
    %230 = arith.mulf %229, %228 : vector<2x128xf32>
    %cst_81 = arith.constant 5.000000e-01 : f32
    %231 = vector.broadcast %cst_81 : f32 to vector<2x128xf32>
    %232 = arith.addf %230, %231 : vector<2x128xf32>
    %233 = vector.extract_strided_slice %224 {offsets = [0, 128], sizes = [2, 128], strides = [1, 1]} : vector<2x512xf32> to vector<2x128xf32>
    %cst_82 = arith.constant 5.000000e-01 : f32
    %234 = vector.broadcast %cst_82 : f32 to vector<2x128xf32>
    %235 = arith.mulf %234, %233 : vector<2x128xf32>
    %236 = math.tanh %235 : vector<2x128xf32>
    %cst_83 = arith.constant 5.000000e-01 : f32
    %237 = vector.broadcast %cst_83 : f32 to vector<2x128xf32>
    %238 = arith.mulf %237, %236 : vector<2x128xf32>
    %cst_84 = arith.constant 5.000000e-01 : f32
    %239 = vector.broadcast %cst_84 : f32 to vector<2x128xf32>
    %240 = arith.addf %238, %239 : vector<2x128xf32>
    %241 = vector.extract_strided_slice %224 {offsets = [0, 256], sizes = [2, 128], strides = [1, 1]} : vector<2x512xf32> to vector<2x128xf32>
    %242 = math.tanh %241 : vector<2x128xf32>
    %243 = vector.extract_strided_slice %224 {offsets = [0, 384], sizes = [2, 128], strides = [1, 1]} : vector<2x512xf32> to vector<2x128xf32>
    %cst_85 = arith.constant 5.000000e-01 : f32
    %244 = vector.broadcast %cst_85 : f32 to vector<2x128xf32>
    %245 = arith.mulf %244, %243 : vector<2x128xf32>
    %246 = math.tanh %245 : vector<2x128xf32>
    %cst_86 = arith.constant 5.000000e-01 : f32
    %247 = vector.broadcast %cst_86 : f32 to vector<2x128xf32>
    %248 = arith.mulf %247, %246 : vector<2x128xf32>
    %cst_87 = arith.constant 5.000000e-01 : f32
    %249 = vector.broadcast %cst_87 : f32 to vector<2x128xf32>
    %250 = arith.addf %248, %249 : vector<2x128xf32>
    %251 = arith.mulf %240, %211 : vector<2x128xf32>
    %252 = arith.mulf %232, %242 : vector<2x128xf32>
    %253 = arith.addf %251, %252 : vector<2x128xf32>
    %254 = math.tanh %253 : vector<2x128xf32>
    %255 = arith.mulf %250, %254 : vector<2x128xf32>
    %c6_i32 = arith.constant 6 : i32
    %256 = arith.index_cast %c6_i32 : i32 to index
    %c0_88 = arith.constant 0 : index
    %c0_89 = arith.constant 0 : index
    %257 = vector.load %arg0[%256, %c0_88, %c0_89] : memref<8x2x1xf32, #tpu.memory_space<vmem>>, vector<1x2x1xf32>
    %258 = vector.shape_cast %257 : vector<1x2x1xf32> to vector<2x1xf32>
    %259 = vector.broadcast %258 : vector<2x1xf32> to vector<2x512xf32>
    %260 = vector.broadcast %0 : vector<1x512xf32> to vector<2x512xf32>
    %261 = arith.mulf %259, %260 : vector<2x512xf32>
    %262 = vector.broadcast %1 : vector<1x512xf32> to vector<2x512xf32>
    %263 = arith.addf %261, %262 : vector<2x512xf32>
    %c0_90 = arith.constant 0 : index
    %c0_91 = arith.constant 0 : index
    %264 = vector.load %arg3[%c0_90, %c0_91] : memref<128x512xf32, #tpu.memory_space<vmem>>, vector<128x512xf32>
    %cst_92 = arith.constant dense<0.000000e+00> : vector<2x512xf32>
    %265 = tpu.matmul %255, %264, %cst_92 {dimension_numbers = #tpu.dot_dimension_numbers<[1], [0], [0], [1], [0, 0, 1, 1], [], []>} : vector<2x128xf32>, vector<128x512xf32>, vector<2x512xf32> -> vector<2x512xf32>
    %266 = arith.addf %263, %265 : vector<2x512xf32>
    %267 = vector.extract_strided_slice %266 {offsets = [0, 0], sizes = [2, 128], strides = [1, 1]} : vector<2x512xf32> to vector<2x128xf32>
    %cst_93 = arith.constant 5.000000e-01 : f32
    %268 = vector.broadcast %cst_93 : f32 to vector<2x128xf32>
    %269 = arith.mulf %268, %267 : vector<2x128xf32>
    %270 = math.tanh %269 : vector<2x128xf32>
    %cst_94 = arith.constant 5.000000e-01 : f32
    %271 = vector.broadcast %cst_94 : f32 to vector<2x128xf32>
    %272 = arith.mulf %271, %270 : vector<2x128xf32>
    %cst_95 = arith.constant 5.000000e-01 : f32
    %273 = vector.broadcast %cst_95 : f32 to vector<2x128xf32>
    %274 = arith.addf %272, %273 : vector<2x128xf32>
    %275 = vector.extract_strided_slice %266 {offsets = [0, 128], sizes = [2, 128], strides = [1, 1]} : vector<2x512xf32> to vector<2x128xf32>
    %cst_96 = arith.constant 5.000000e-01 : f32
    %276 = vector.broadcast %cst_96 : f32 to vector<2x128xf32>
    %277 = arith.mulf %276, %275 : vector<2x128xf32>
    %278 = math.tanh %277 : vector<2x128xf32>
    %cst_97 = arith.constant 5.000000e-01 : f32
    %279 = vector.broadcast %cst_97 : f32 to vector<2x128xf32>
    %280 = arith.mulf %279, %278 : vector<2x128xf32>
    %cst_98 = arith.constant 5.000000e-01 : f32
    %281 = vector.broadcast %cst_98 : f32 to vector<2x128xf32>
    %282 = arith.addf %280, %281 : vector<2x128xf32>
    %283 = vector.extract_strided_slice %266 {offsets = [0, 256], sizes = [2, 128], strides = [1, 1]} : vector<2x512xf32> to vector<2x128xf32>
    %284 = math.tanh %283 : vector<2x128xf32>
    %285 = vector.extract_strided_slice %266 {offsets = [0, 384], sizes = [2, 128], strides = [1, 1]} : vector<2x512xf32> to vector<2x128xf32>
    %cst_99 = arith.constant 5.000000e-01 : f32
    %286 = vector.broadcast %cst_99 : f32 to vector<2x128xf32>
    %287 = arith.mulf %286, %285 : vector<2x128xf32>
    %288 = math.tanh %287 : vector<2x128xf32>
    %cst_100 = arith.constant 5.000000e-01 : f32
    %289 = vector.broadcast %cst_100 : f32 to vector<2x128xf32>
    %290 = arith.mulf %289, %288 : vector<2x128xf32>
    %cst_101 = arith.constant 5.000000e-01 : f32
    %291 = vector.broadcast %cst_101 : f32 to vector<2x128xf32>
    %292 = arith.addf %290, %291 : vector<2x128xf32>
    %293 = arith.mulf %282, %253 : vector<2x128xf32>
    %294 = arith.mulf %274, %284 : vector<2x128xf32>
    %295 = arith.addf %293, %294 : vector<2x128xf32>
    %296 = math.tanh %295 : vector<2x128xf32>
    %297 = arith.mulf %292, %296 : vector<2x128xf32>
    %c7_i32 = arith.constant 7 : i32
    %298 = arith.index_cast %c7_i32 : i32 to index
    %c0_102 = arith.constant 0 : index
    %c0_103 = arith.constant 0 : index
    %299 = vector.load %arg0[%298, %c0_102, %c0_103] : memref<8x2x1xf32, #tpu.memory_space<vmem>>, vector<1x2x1xf32>
    %300 = vector.shape_cast %299 : vector<1x2x1xf32> to vector<2x1xf32>
    %301 = vector.broadcast %300 : vector<2x1xf32> to vector<2x512xf32>
    %302 = vector.broadcast %0 : vector<1x512xf32> to vector<2x512xf32>
    %303 = arith.mulf %301, %302 : vector<2x512xf32>
    %304 = vector.broadcast %1 : vector<1x512xf32> to vector<2x512xf32>
    %305 = arith.addf %303, %304 : vector<2x512xf32>
    %c0_104 = arith.constant 0 : index
    %c0_105 = arith.constant 0 : index
    %306 = vector.load %arg3[%c0_104, %c0_105] : memref<128x512xf32, #tpu.memory_space<vmem>>, vector<128x512xf32>
    %cst_106 = arith.constant dense<0.000000e+00> : vector<2x512xf32>
    %307 = tpu.matmul %297, %306, %cst_106 {dimension_numbers = #tpu.dot_dimension_numbers<[1], [0], [0], [1], [0, 0, 1, 1], [], []>} : vector<2x128xf32>, vector<128x512xf32>, vector<2x512xf32> -> vector<2x512xf32>
    %308 = arith.addf %305, %307 : vector<2x512xf32>
    %309 = vector.extract_strided_slice %308 {offsets = [0, 0], sizes = [2, 128], strides = [1, 1]} : vector<2x512xf32> to vector<2x128xf32>
    %cst_107 = arith.constant 5.000000e-01 : f32
    %310 = vector.broadcast %cst_107 : f32 to vector<2x128xf32>
    %311 = arith.mulf %310, %309 : vector<2x128xf32>
    %312 = math.tanh %311 : vector<2x128xf32>
    %cst_108 = arith.constant 5.000000e-01 : f32
    %313 = vector.broadcast %cst_108 : f32 to vector<2x128xf32>
    %314 = arith.mulf %313, %312 : vector<2x128xf32>
    %cst_109 = arith.constant 5.000000e-01 : f32
    %315 = vector.broadcast %cst_109 : f32 to vector<2x128xf32>
    %316 = arith.addf %314, %315 : vector<2x128xf32>
    %317 = vector.extract_strided_slice %308 {offsets = [0, 128], sizes = [2, 128], strides = [1, 1]} : vector<2x512xf32> to vector<2x128xf32>
    %cst_110 = arith.constant 5.000000e-01 : f32
    %318 = vector.broadcast %cst_110 : f32 to vector<2x128xf32>
    %319 = arith.mulf %318, %317 : vector<2x128xf32>
    %320 = math.tanh %319 : vector<2x128xf32>
    %cst_111 = arith.constant 5.000000e-01 : f32
    %321 = vector.broadcast %cst_111 : f32 to vector<2x128xf32>
    %322 = arith.mulf %321, %320 : vector<2x128xf32>
    %cst_112 = arith.constant 5.000000e-01 : f32
    %323 = vector.broadcast %cst_112 : f32 to vector<2x128xf32>
    %324 = arith.addf %322, %323 : vector<2x128xf32>
    %325 = vector.extract_strided_slice %308 {offsets = [0, 256], sizes = [2, 128], strides = [1, 1]} : vector<2x512xf32> to vector<2x128xf32>
    %326 = math.tanh %325 : vector<2x128xf32>
    %327 = vector.extract_strided_slice %308 {offsets = [0, 384], sizes = [2, 128], strides = [1, 1]} : vector<2x512xf32> to vector<2x128xf32>
    %cst_113 = arith.constant 5.000000e-01 : f32
    %328 = vector.broadcast %cst_113 : f32 to vector<2x128xf32>
    %329 = arith.mulf %328, %327 : vector<2x128xf32>
    %330 = math.tanh %329 : vector<2x128xf32>
    %cst_114 = arith.constant 5.000000e-01 : f32
    %331 = vector.broadcast %cst_114 : f32 to vector<2x128xf32>
    %332 = arith.mulf %331, %330 : vector<2x128xf32>
    %cst_115 = arith.constant 5.000000e-01 : f32
    %333 = vector.broadcast %cst_115 : f32 to vector<2x128xf32>
    %334 = arith.addf %332, %333 : vector<2x128xf32>
    %335 = arith.mulf %324, %295 : vector<2x128xf32>
    %336 = arith.mulf %316, %326 : vector<2x128xf32>
    %337 = arith.addf %335, %336 : vector<2x128xf32>
    %338 = math.tanh %337 : vector<2x128xf32>
    %339 = arith.mulf %334, %338 : vector<2x128xf32>
    %c8_i32 = arith.constant 8 : i32
    %c0_116 = arith.constant 0 : index
    %c0_117 = arith.constant 0 : index
    %340 = vector.load %arg4[%c0_116, %c0_117] : memref<128x1xf32, #tpu.memory_space<vmem>>, vector<128x1xf32>
    %cst_118 = arith.constant dense<0.000000e+00> : vector<2x1xf32>
    %341 = tpu.matmul %339, %340, %cst_118 {dimension_numbers = #tpu.dot_dimension_numbers<[1], [0], [0], [1], [0, 0, 1, 1], [], []>} : vector<2x128xf32>, vector<128x1xf32>, vector<2x1xf32> -> vector<2x1xf32>
    %c0_119 = arith.constant 0 : index
    %c0_120 = arith.constant 0 : index
    %342 = memref.load %arg5[%c0_119, %c0_120] : memref<1x1xf32, #tpu.memory_space<smem>>
    %343 = vector.broadcast %342 : f32 to vector<2x1xf32>
    %344 = arith.addf %341, %343 : vector<2x1xf32>
    %c0_121 = arith.constant 0 : index
    %c0_122 = arith.constant 0 : index
    %345 = vector.load %arg6[%c0_121, %c0_122] : memref<2x1xf32, #tpu.memory_space<vmem>>, vector<2x1xf32>
    tpu.vector_store %arg6[%c0_121, %c0_122], %344 {strides = array<i32>} : memref<2x1xf32, #tpu.memory_space<vmem>>, vector<2x1xf32>,
    return
  }
}

</mosaic_0001>

<llo_original>
// kernel: lstm_forward.1
$region0: #{lstm_forward.1}
  #allocation0 [shape = 'u32[]', space=smem, size = 0x4, offset = 0x4, fixed_abs, tag = 'smem constant byte address 0x4 - core index']
  #allocation1 [shape = 'u32[144,128]{1,0:T(1,128)}', space=vmem, size = 0x12000, scoped, tag = 'internal scratch']
  #allocation2 [shape = 'f32[1,1]{1,0:T(1,128)S(6)}', space=smem, size = 0x200, scoped, tag = 'scoped memory for lstm_forward.1']
  %s0 = inlined_call_operand.vmem [shape: f32[8,2,1], index: 0, kind: input, shape index: {}]
  %s1 = inlined_call_operand.vmem [shape: f32[1,512], index: 1, kind: input, shape index: {}]
  %s2 = inlined_call_operand.vmem [shape: f32[1,512], index: 2, kind: input, shape index: {}]
  %s3 = inlined_call_operand.hbm [shape: f32[128,512], index: 3, kind: input, shape index: {}]
  %s4 = inlined_call_operand.vmem [shape: f32[128,1], index: 4, kind: input, shape index: {}]
  %s5 = inlined_call_operand.<no memory space> [shape: f32[1,1], index: 5, kind: input, shape index: {}]
  %s6 = inlined_call_operand.vmem [shape: f32[2,1], index: 6, kind: output, shape index: {}]
  %s7 = sld [smem:[#allocation0]]
  $region38: #{lstm_forward.1} parent=0
    _
  %s9 = ssub.s32 1, %s7
  %s10 = scalar_select 0, %s9, %s7
  %11 = sst [smem:[#allocation2]] %s5
  $region1: #{lstm_forward.1} parent=0
    #allocation3 [shape = 'u8[262144]{0}', space=vmem, size = 0x40000, scoped, tag = 'input window, operand 3, single buffered']
    #allocation4 [shape = 's32[1]{0}', space=sflag, size = 0x4, scoped, tag = 'scoped memory for lstm_forward.1']
    %12 = vsyncpa [#allocation4], 0
    // Predicated region
    $region2: #{lstm_forward.1} parent=1 // pred_check
      _
    $region3: #{lstm_forward.1} parent=1 // pred_check_branch
      %14 = sbr.rel (0) target = $region5
    $region4: #{lstm_forward.1} parent=1 // pred_region
      _
    $region5: #{lstm_forward.1} parent=1 // pred_fallthru
      _
    // Predicated region
    $region6: #{lstm_forward.1} parent=1 // pred_check
      _
    $region7: #{lstm_forward.1} parent=1 // pred_check_branch
      %16 = sbr.rel (0) target = $region9
    $region8: #{lstm_forward.1} parent=1 // pred_region
      _
    $region9: #{lstm_forward.1} parent=1 // pred_fallthru
      _
    // Predicated region
    $region10: #{lstm_forward.1} parent=1 // pred_check
      _
    $region11: #{lstm_forward.1} parent=1 // pred_check_branch
      %18 = sbr.rel (0) target = $region13
    $region12: #{lstm_forward.1} parent=1 // pred_region
      _
    $region13: #{lstm_forward.1} parent=1 // pred_fallthru
      _
    // Predicated region
    $region14: #{lstm_forward.1} parent=1 // pred_check
      _
    $region15: #{lstm_forward.1} parent=1 // pred_check_branch
      %20 = sbr.rel (0) target = $region17
    $region16: #{lstm_forward.1} parent=1 // pred_region
      %s22 = ssub.s32 8192, 8192
      %23 = vsyncadd [#allocation4], %s22
      %s24 = sshll.u32 [#allocation3], 4
      %s25 = int_to_ptr.vmem [resolvable:$true] %s24
      %30 = dma.hbm_to_vmem [thread:$0]  %s3, 8192, %s25, [#allocation4], 512, 512, 32
    $region17: #{lstm_forward.1} parent=1 // pred_fallthru
      _
    // Predicated region
    $region18: #{lstm_forward.1} parent=1 // pred_check
      _
    $region19: #{lstm_forward.1} parent=1 // pred_check_branch
      %32 = sbr.rel (0) target = $region21
    $region20: #{lstm_forward.1} parent=1 // pred_region
      _
    $region21: #{lstm_forward.1} parent=1 // pred_fallthru
      _
    // Predicated region
    $region22: #{lstm_forward.1} parent=1 // pred_check
      _
    $region23: #{lstm_forward.1} parent=1 // pred_check_branch
      %34 = sbr.rel (0) target = $region25
    $region24: #{lstm_forward.1} parent=1 // pred_region
      _
    $region25: #{lstm_forward.1} parent=1 // pred_fallthru
      _
    // Predicated region
    $region26: #{lstm_forward.1} parent=1 // pred_check
      _
    $region27: #{lstm_forward.1} parent=1 // pred_check_branch
      %36 = sbr.rel (0) target = $region29
    $region28: #{lstm_forward.1} parent=1 // pred_region
      %37 = dma.done [#allocation4], 8192
    $region29: #{lstm_forward.1} parent=1 // pred_fallthru
      _
    %v38 = vld [vmem:[%s1] sm:$0xf]
    %v39 = vld [vmem:[%s2] sm:$0xf]
    %v40 = vld [vmem:[%s0] sm:$0x3]
    %42 = vset.pattern.permute.xlu0 0
    %43 = vperm.xlu0 %42, %v40
    %v44 = vpop.permute.xlu0 %43
    %v47 = vlaneseq
    %v48 = vshrl.u32 %v47, 7
    %v49 = vsub.s32 0, %v48
    %v50 = vrot.slane %v38, %v49
    %v51 = vlaneseq
    %v52 = vshrl.u32 %v51, 7
    %v53 = vsub.s32 1, %v52
    %v54 = vrot.slane %v38, %v53
    %v55 = vlaneseq
    %v56 = vshrl.u32 %v55, 7
    %v57 = vsub.s32 2, %v56
    %v58 = vrot.slane %v38, %v57
    %v59 = vlaneseq
    %v60 = vshrl.u32 %v59, 7
    %v61 = vsub.s32 3, %v60
    %v62 = vrot.slane %v38, %v61
    %v67 = vmul.f32 %v44, %v50
    %v68 = vmul.f32 %v44, %v54
    %v69 = vmul.f32 %v44, %v58
    %v70 = vmul.f32 %v44, %v62
    %v72 = vlaneseq
    %v73 = vshrl.u32 %v72, 7
    %v74 = vsub.s32 0, %v73
    %v75 = vrot.slane %v39, %v74
    %v76 = vlaneseq
    %v77 = vshrl.u32 %v76, 7
    %v78 = vsub.s32 1, %v77
    %v79 = vrot.slane %v39, %v78
    %v80 = vlaneseq
    %v81 = vshrl.u32 %v80, 7
    %v82 = vsub.s32 2, %v81
    %v83 = vrot.slane %v39, %v82
    %v84 = vlaneseq
    %v85 = vshrl.u32 %v84, 7
    %v86 = vsub.s32 3, %v85
    %v87 = vrot.slane %v39, %v86
    %v92 = vadd.f32 %v67, %v75
    %v93 = vadd.f32 %v68, %v79
    %v94 = vadd.f32 %v69, %v83
    %v95 = vadd.f32 %v70, %v87
    %v96 = vld [vmem:[#allocation3] sm:$0xff]
    %v97 = vld [vmem:[#allocation3 + $0x8] sm:$0xff]
    %v98 = vld [vmem:[#allocation3 + $0x10] sm:$0xff]
    %v99 = vld [vmem:[#allocation3 + $0x18] sm:$0xff]
    %v100 = vld [vmem:[#allocation3 + $0x20] sm:$0xff]
    %v101 = vld [vmem:[#allocation3 + $0x28] sm:$0xff]
    %v102 = vld [vmem:[#allocation3 + $0x30] sm:$0xff]
    %v103 = vld [vmem:[#allocation3 + $0x38] sm:$0xff]
    %v104 = vld [vmem:[#allocation3 + $0x40] sm:$0xff]
    %v105 = vld [vmem:[#allocation3 + $0x48] sm:$0xff]
    %v106 = vld [vmem:[#allocation3 + $0x50] sm:$0xff]
    %v107 = vld [vmem:[#allocation3 + $0x58] sm:$0xff]
    %v108 = vld [vmem:[#allocation3 + $0x60] sm:$0xff]
    %v109 = vld [vmem:[#allocation3 + $0x68] sm:$0xff]
    %v110 = vld [vmem:[#allocation3 + $0x70] sm:$0xff]
    %v111 = vld [vmem:[#allocation3 + $0x78] sm:$0xff]
    %v112 = vld [vmem:[#allocation3 + $0x80] sm:$0xff]
    %v113 = vld [vmem:[#allocation3 + $0x88] sm:$0xff]
    %v114 = vld [vmem:[#allocation3 + $0x90] sm:$0xff]
    %v115 = vld [vmem:[#allocation3 + $0x98] sm:$0xff]
    %v116 = vld [vmem:[#allocation3 + $0xa0] sm:$0xff]
    %v117 = vld [vmem:[#allocation3 + $0xa8] sm:$0xff]
    %v118 = vld [vmem:[#allocation3 + $0xb0] sm:$0xff]
    %v119 = vld [vmem:[#allocation3 + $0xb8] sm:$0xff]
    %v120 = vld [vmem:[#allocation3 + $0xc0] sm:$0xff]
    %v121 = vld [vmem:[#allocation3 + $0xc8] sm:$0xff]
    %v122 = vld [vmem:[#allocation3 + $0xd0] sm:$0xff]
    %v123 = vld [vmem:[#allocation3 + $0xd8] sm:$0xff]
    %v124 = vld [vmem:[#allocation3 + $0xe0] sm:$0xff]
    %v125 = vld [vmem:[#allocation3 + $0xe8] sm:$0xff]
    %v126 = vld [vmem:[#allocation3 + $0xf0] sm:$0xff]
    %v127 = vld [vmem:[#allocation3 + $0xf8] sm:$0xff]
    %v128 = vld [vmem:[#allocation3 + $0x100] sm:$0xff]
    %v129 = vld [vmem:[#allocation3 + $0x108] sm:$0xff]
    %v130 = vld [vmem:[#allocation3 + $0x110] sm:$0xff]
    %v131 = vld [vmem:[#allocation3 + $0x118] sm:$0xff]
    %v132 = vld [vmem:[#allocation3 + $0x120] sm:$0xff]
    %v133 = vld [vmem:[#allocation3 + $0x128] sm:$0xff]
    %v134 = vld [vmem:[#allocation3 + $0x130] sm:$0xff]
    %v135 = vld [vmem:[#allocation3 + $0x138] sm:$0xff]
    %v136 = vld [vmem:[#allocation3 + $0x140] sm:$0xff]
    %v137 = vld [vmem:[#allocation3 + $0x148] sm:$0xff]
    %v138 = vld [vmem:[#allocation3 + $0x150] sm:$0xff]
    %v139 = vld [vmem:[#allocation3 + $0x158] sm:$0xff]
    %v140 = vld [vmem:[#allocation3 + $0x160] sm:$0xff]
    %v141 = vld [vmem:[#allocation3 + $0x168] sm:$0xff]
    %v142 = vld [vmem:[#allocation3 + $0x170] sm:$0xff]
    %v143 = vld [vmem:[#allocation3 + $0x178] sm:$0xff]
    %v144 = vld [vmem:[#allocation3 + $0x180] sm:$0xff]
    %v145 = vld [vmem:[#allocation3 + $0x188] sm:$0xff]
    %v146 = vld [vmem:[#allocation3 + $0x190] sm:$0xff]
    %v147 = vld [vmem:[#allocation3 + $0x198] sm:$0xff]
    %v148 = vld [vmem:[#allocation3 + $0x1a0] sm:$0xff]
    %v149 = vld [vmem:[#allocation3 + $0x1a8] sm:$0xff]
    %v150 = vld [vmem:[#allocation3 + $0x1b0] sm:$0xff]
    %v151 = vld [vmem:[#allocation3 + $0x1b8] sm:$0xff]
    %v152 = vld [vmem:[#allocation3 + $0x1c0] sm:$0xff]
    %v153 = vld [vmem:[#allocation3 + $0x1c8] sm:$0xff]
    %v154 = vld [vmem:[#allocation3 + $0x1d0] sm:$0xff]
    %v155 = vld [vmem:[#allocation3 + $0x1d8] sm:$0xff]
    %v156 = vld [vmem:[#allocation3 + $0x1e0] sm:$0xff]
    %v157 = vld [vmem:[#allocation3 + $0x1e8] sm:$0xff]
    %v158 = vld [vmem:[#allocation3 + $0x1f0] sm:$0xff]
    %v159 = vld [vmem:[#allocation3 + $0x1f8] sm:$0xff]
    %160 = vmatprep.subr.mxu0 %v97
    %161 = vmatpush1.msra.mxu0 %v96
    %162 = vmatprep.subr.mxu0 %v101
    %163 = vmatpush1.msra.mxu0 %v100
    %164 = vmatprep.subr.mxu0 %v105
    %165 = vmatpush1.msra.mxu0 %v104
    %166 = vmatprep.subr.mxu0 %v109
    %167 = vmatpush1.msra.mxu0 %v108
    %168 = vmatprep.subr.mxu0 %v113
    %169 = vmatpush1.msra.mxu0 %v112
    %170 = vmatprep.subr.mxu0 %v117
    %171 = vmatpush1.msra.mxu0 %v116
    %172 = vmatprep.subr.mxu0 %v121
    %173 = vmatpush1.msra.mxu0 %v120
    %174 = vmatprep.subr.mxu0 %v125
    %175 = vmatpush1.msra.mxu0 %v124
    %176 = vmatprep.subr.mxu0 %v129
    %177 = vmatpush1.msra.mxu0 %v128
    %178 = vmatprep.subr.mxu0 %v133
    %179 = vmatpush1.msra.mxu0 %v132
    %180 = vmatprep.subr.mxu0 %v137
    %181 = vmatpush1.msra.mxu0 %v136
    %182 = vmatprep.subr.mxu0 %v141
    %183 = vmatpush1.msra.mxu0 %v140
    %184 = vmatprep.subr.mxu0 %v145
    %185 = vmatpush1.msra.mxu0 %v144
    %186 = vmatprep.subr.mxu0 %v149
    %187 = vmatpush1.msra.mxu0 %v148
    %188 = vmatprep.subr.mxu0 %v153
    %189 = vmatpush1.msra.mxu0 %v152
    %190 = vmatprep.subr.mxu0 %v157
    %191 = vmatpush1.msra.mxu0 %v156
    %192 = vmatprep.subr.mxu0 0.0
    %193 = vmatpush1.msra.mxu0 0.0
    %194 = vmatprep.subr.mxu0 0.0
    %195 = vmatpush1.msra.mxu0 0.0
    %196 = vmatprep.subr.mxu0 0.0
    %197 = vmatpush1.msra.mxu0 0.0
    %198 = vmatprep.subr.mxu0 0.0
    %199 = vmatpush1.msra.mxu0 0.0
    %200 = vmatprep.subr.mxu0 0.0
    %201 = vmatpush1.msra.mxu0 0.0
    %202 = vmatprep.subr.mxu0 0.0
    %203 = vmatpush1.msra.mxu0 0.0
    %204 = vmatprep.subr.mxu0 0.0
    %205 = vmatpush1.msra.mxu0 0.0
    %206 = vmatprep.subr.mxu0 0.0
    %207 = vmatpush1.msra.mxu0 0.0
    %208 = vmatprep.subr.mxu0 0.0
    %209 = vmatpush1.msra.mxu0 0.0
    %210 = vmatprep.subr.mxu0 0.0
    %211 = vmatpush1.msra.mxu0 0.0
    %212 = vmatprep.subr.mxu0 0.0
    %213 = vmatpush1.msra.mxu0 0.0
    %214 = vmatprep.subr.mxu0 0.0
    %215 = vmatpush1.msra.mxu0 0.0
    %216 = vmatprep.subr.mxu0 0.0
    %217 = vmatpush1.msra.mxu0 0.0
    %218 = vmatprep.subr.mxu0 0.0
    %219 = vmatpush1.msra.mxu0 0.0
    %220 = vmatprep.subr.mxu0 0.0
    %221 = vmatpush1.msra.mxu0 0.0
    %222 = vmatprep.subr.mxu0 0.0
    %223 = vmatpush1.msra.mxu0 0.0
    %224 = vmatprep.mubr.f32.mxu0 0.0
    %225 = vmatmul.mubr.f32.gmra.mrb[0].mxu0 0.0
    %v226 = vpop.f32.mrb[0].mxu0
    %v227 = vadd.f32 0.0, %v226
    %v228 = vpop.f32.mrb[0].mxu0
    %v229 = vadd.f32 0.0, %v228
    %230 = vdwg.mxu0
    %231 = vmatprep.subr.mxu0 %v99
    %232 = vmatpush1.msra.mxu0 %v98
    %233 = vmatprep.subr.mxu0 %v103
    %234 = vmatpush1.msra.mxu0 %v102
    %235 = vmatprep.subr.mxu0 %v107
    %236 = vmatpush1.msra.mxu0 %v106
    %237 = vmatprep.subr.mxu0 %v111
    %238 = vmatpush1.msra.mxu0 %v110
    %239 = vmatprep.subr.mxu0 %v115
    %240 = vmatpush1.msra.mxu0 %v114
    %241 = vmatprep.subr.mxu0 %v119
    %242 = vmatpush1.msra.mxu0 %v118
    %243 = vmatprep.subr.mxu0 %v123
    %244 = vmatpush1.msra.mxu0 %v122
    %245 = vmatprep.subr.mxu0 %v127
    %246 = vmatpush1.msra.mxu0 %v126
    %247 = vmatprep.subr.mxu0 %v131
    %248 = vmatpush1.msra.mxu0 %v130
    %249 = vmatprep.subr.mxu0 %v135
    %250 = vmatpush1.msra.mxu0 %v134
    %251 = vmatprep.subr.mxu0 %v139
    %252 = vmatpush1.msra.mxu0 %v138
    %253 = vmatprep.subr.mxu0 %v143
    %254 = vmatpush1.msra.mxu0 %v142
    %255 = vmatprep.subr.mxu0 %v147
    %256 = vmatpush1.msra.mxu0 %v146
    %257 = vmatprep.subr.mxu0 %v151
    %258 = vmatpush1.msra.mxu0 %v150
    %259 = vmatprep.subr.mxu0 %v155
    %260 = vmatpush1.msra.mxu0 %v154
    %261 = vmatprep.subr.mxu0 %v159
    %262 = vmatpush1.msra.mxu0 %v158
    %263 = vmatprep.subr.mxu0 0.0
    %264 = vmatpush1.msra.mxu0 0.0
    %265 = vmatprep.subr.mxu0 0.0
    %266 = vmatpush1.msra.mxu0 0.0
    %267 = vmatprep.subr.mxu0 0.0
    %268 = vmatpush1.msra.mxu0 0.0
    %269 = vmatprep.subr.mxu0 0.0
    %270 = vmatpush1.msra.mxu0 0.0
    %271 = vmatprep.subr.mxu0 0.0
    %272 = vmatpush1.msra.mxu0 0.0
    %273 = vmatprep.subr.mxu0 0.0
    %274 = vmatpush1.msra.mxu0 0.0
    %275 = vmatprep.subr.mxu0 0.0
    %276 = vmatpush1.msra.mxu0 0.0
    %277 = vmatprep.subr.mxu0 0.0
    %278 = vmatpush1.msra.mxu0 0.0
    %279 = vmatprep.subr.mxu0 0.0
    %280 = vmatpush1.msra.mxu0 0.0
    %281 = vmatprep.subr.mxu0 0.0
    %282 = vmatpush1.msra.mxu0 0.0
    %283 = vmatprep.subr.mxu0 0.0
    %284 = vmatpush1.msra.mxu0 0.0
    %285 = vmatprep.subr.mxu0 0.0
    %286 = vmatpush1.msra.mxu0 0.0
    %287 = vmatprep.subr.mxu0 0.0
    %288 = vmatpush1.msra.mxu0 0.0
    %289 = vmatprep.subr.mxu0 0.0
    %290 = vmatpush1.msra.mxu0 0.0
    %291 = vmatprep.subr.mxu0 0.0
    %292 = vmatpush1.msra.mxu0 0.0
    %293 = vmatprep.subr.mxu0 0.0
    %294 = vmatpush1.msra.mxu0 0.0
    %295 = vmatprep.mubr.f32.mxu0 0.0
    %296 = vmatmul.mubr.f32.gmra.mrb[0].mxu0 0.0
    %v297 = vpop.f32.mrb[0].mxu0
    %v298 = vadd.f32 0.0, %v297
    %v299 = vpop.f32.mrb[0].mxu0
    %v300 = vadd.f32 0.0, %v299
    %301 = vdwg.mxu0
    %v302 = vadd.f32 %v92, %v227
    %v303 = vadd.f32 %v93, %v229
    %v304 = vadd.f32 %v94, %v298
    %v305 = vadd.f32 %v95, %v300
    %v306 = vmul.f32 %v302, 0.5
    %v307 = vtanh.pop %v306
    %v308 = vmul.f32 %v307, 0.5
    %v309 = vadd.f32 %v308, 0.5
    %v310 = vmul.f32 %v303, 0.5
    %v311 = vtanh.pop %v310
    %v312 = vmul.f32 %v311, 0.5
    %v313 = vadd.f32 %v312, 0.5
    %v314 = vtanh.pop %v304
    %v315 = vmul.f32 %v305, 0.5
    %v316 = vtanh.pop %v315
    %v317 = vmul.f32 %v316, 0.5
    %v318 = vadd.f32 %v317, 0.5
    %v319 = vmul.f32 %v313, 0.0
    %v320 = vmul.f32 %v309, %v314
    %v321 = vadd.f32 %v319, %v320
    %v322 = vtanh.pop %v321
    %v323 = vmul.f32 %v318, %v322
    %s324 = scalar_lea.vmem %s0, 2
    %v325 = vld [vmem:[%s324] sm:$0x3]
    %327 = vset.pattern.permute.xlu0 0
    %328 = vperm.xlu0 %327, %v325
    %v329 = vpop.permute.xlu0 %328
    %v331 = vmul.f32 %v329, %v50
    %v332 = vmul.f32 %v329, %v54
    %v333 = vmul.f32 %v329, %v58
    %v334 = vmul.f32 %v329, %v62
    %v335 = vadd.f32 %v331, %v75
    %v336 = vadd.f32 %v332, %v79
    %v337 = vadd.f32 %v333, %v83
    %v338 = vadd.f32 %v334, %v87
    %339 = vmatprep.subr.mxu0 %v97
    %340 = vmatpush1.msra.mxu0 %v96
    %341 = vmatprep.subr.mxu0 %v101
    %342 = vmatpush1.msra.mxu0 %v100
    %343 = vmatprep.subr.mxu0 %v105
    %344 = vmatpush1.msra.mxu0 %v104
    %345 = vmatprep.subr.mxu0 %v109
    %346 = vmatpush1.msra.mxu0 %v108
    %347 = vmatprep.subr.mxu0 %v113
    %348 = vmatpush1.msra.mxu0 %v112
    %349 = vmatprep.subr.mxu0 %v117
    %350 = vmatpush1.msra.mxu0 %v116
    %351 = vmatprep.subr.mxu0 %v121
    %352 = vmatpush1.msra.mxu0 %v120
    %353 = vmatprep.subr.mxu0 %v125
    %354 = vmatpush1.msra.mxu0 %v124
    %355 = vmatprep.subr.mxu0 %v129
    %356 = vmatpush1.msra.mxu0 %v128
    %357 = vmatprep.subr.mxu0 %v133
    %358 = vmatpush1.msra.mxu0 %v132
    %359 = vmatprep.subr.mxu0 %v137
    %360 = vmatpush1.msra.mxu0 %v136
    %361 = vmatprep.subr.mxu0 %v141
    %362 = vmatpush1.msra.mxu0 %v140
    %363 = vmatprep.subr.mxu0 %v145
    %364 = vmatpush1.msra.mxu0 %v144
    %365 = vmatprep.subr.mxu0 %v149
    %366 = vmatpush1.msra.mxu0 %v148
    %367 = vmatprep.subr.mxu0 %v153
    %368 = vmatpush1.msra.mxu0 %v152
    %369 = vmatprep.subr.mxu0 %v157
    %370 = vmatpush1.msra.mxu0 %v156
    %371 = vmatprep.subr.mxu0 0.0
    %372 = vmatpush1.msra.mxu0 0.0
    %373 = vmatprep.subr.mxu0 0.0
    %374 = vmatpush1.msra.mxu0 0.0
    %375 = vmatprep.subr.mxu0 0.0
    %376 = vmatpush1.msra.mxu0 0.0
    %377 = vmatprep.subr.mxu0 0.0
    %378 = vmatpush1.msra.mxu0 0.0
    %379 = vmatprep.subr.mxu0 0.0
    %380 = vmatpush1.msra.mxu0 0.0
    %381 = vmatprep.subr.mxu0 0.0
    %382 = vmatpush1.msra.mxu0 0.0
    %383 = vmatprep.subr.mxu0 0.0
    %384 = vmatpush1.msra.mxu0 0.0
    %385 = vmatprep.subr.mxu0 0.0
    %386 = vmatpush1.msra.mxu0 0.0
    %387 = vmatprep.subr.mxu0 0.0
    %388 = vmatpush1.msra.mxu0 0.0
    %389 = vmatprep.subr.mxu0 0.0
    %390 = vmatpush1.msra.mxu0 0.0
    %391 = vmatprep.subr.mxu0 0.0
    %392 = vmatpush1.msra.mxu0 0.0
    %393 = vmatprep.subr.mxu0 0.0
    %394 = vmatpush1.msra.mxu0 0.0
    %395 = vmatprep.subr.mxu0 0.0
    %396 = vmatpush1.msra.mxu0 0.0
    %397 = vmatprep.subr.mxu0 0.0
    %398 = vmatpush1.msra.mxu0 0.0
    %399 = vmatprep.subr.mxu0 0.0
    %400 = vmatpush1.msra.mxu0 0.0
    %401 = vmatprep.subr.mxu0 0.0
    %402 = vmatpush1.msra.mxu0 0.0
    %403 = vmatprep.mubr.f32.mxu0 0.0
    %404 = vmatmul.mubr.f32.gmra.mrb[0].mxu0 %v323
    %v405 = vpop.f32.mrb[0].mxu0
    %v406 = vadd.f32 0.0, %v405
    %v407 = vpop.f32.mrb[0].mxu0
    %v408 = vadd.f32 0.0, %v407
    %409 = vdwg.mxu0
    %410 = vmatprep.subr.mxu0 %v99
    %411 = vmatpush1.msra.mxu0 %v98
    %412 = vmatprep.subr.mxu0 %v103
    %413 = vmatpush1.msra.mxu0 %v102
    %414 = vmatprep.subr.mxu0 %v107
    %415 = vmatpush1.msra.mxu0 %v106
    %416 = vmatprep.subr.mxu0 %v111
    %417 = vmatpush1.msra.mxu0 %v110
    %418 = vmatprep.subr.mxu0 %v115
    %419 = vmatpush1.msra.mxu0 %v114
    %420 = vmatprep.subr.mxu0 %v119
    %421 = vmatpush1.msra.mxu0 %v118
    %422 = vmatprep.subr.mxu0 %v123
    %423 = vmatpush1.msra.mxu0 %v122
    %424 = vmatprep.subr.mxu0 %v127
    %425 = vmatpush1.msra.mxu0 %v126
    %426 = vmatprep.subr.mxu0 %v131
    %427 = vmatpush1.msra.mxu0 %v130
    %428 = vmatprep.subr.mxu0 %v135
    %429 = vmatpush1.msra.mxu0 %v134
    %430 = vmatprep.subr.mxu0 %v139
    %431 = vmatpush1.msra.mxu0 %v138
    %432 = vmatprep.subr.mxu0 %v143
    %433 = vmatpush1.msra.mxu0 %v142
    %434 = vmatprep.subr.mxu0 %v147
    %435 = vmatpush1.msra.mxu0 %v146
    %436 = vmatprep.subr.mxu0 %v151
    %437 = vmatpush1.msra.mxu0 %v150
    %438 = vmatprep.subr.mxu0 %v155
    %439 = vmatpush1.msra.mxu0 %v154
    %440 = vmatprep.subr.mxu0 %v159
    %441 = vmatpush1.msra.mxu0 %v158
    %442 = vmatprep.subr.mxu0 0.0
    %443 = vmatpush1.msra.mxu0 0.0
    %444 = vmatprep.subr.mxu0 0.0
    %445 = vmatpush1.msra.mxu0 0.0
    %446 = vmatprep.subr.mxu0 0.0
    %447 = vmatpush1.msra.mxu0 0.0
    %448 = vmatprep.subr.mxu0 0.0
    %449 = vmatpush1.msra.mxu0 0.0
    %450 = vmatprep.subr.mxu0 0.0
    %451 = vmatpush1.msra.mxu0 0.0
    %452 = vmatprep.subr.mxu0 0.0
    %453 = vmatpush1.msra.mxu0 0.0
    %454 = vmatprep.subr.mxu0 0.0
    %455 = vmatpush1.msra.mxu0 0.0
    %456 = vmatprep.subr.mxu0 0.0
    %457 = vmatpush1.msra.mxu0 0.0
    %458 = vmatprep.subr.mxu0 0.0
    %459 = vmatpush1.msra.mxu0 0.0
    %460 = vmatprep.subr.mxu0 0.0
    %461 = vmatpush1.msra.mxu0 0.0
    %462 = vmatprep.subr.mxu0 0.0
    %463 = vmatpush1.msra.mxu0 0.0
    %464 = vmatprep.subr.mxu0 0.0
    %465 = vmatpush1.msra.mxu0 0.0
    %466 = vmatprep.subr.mxu0 0.0
    %467 = vmatpush1.msra.mxu0 0.0
    %468 = vmatprep.subr.mxu0 0.0
    %469 = vmatpush1.msra.mxu0 0.0
    %470 = vmatprep.subr.mxu0 0.0
    %471 = vmatpush1.msra.mxu0 0.0
    %472 = vmatprep.subr.mxu0 0.0
    %473 = vmatpush1.msra.mxu0 0.0
    %474 = vmatprep.mubr.f32.mxu0 0.0
    %475 = vmatmul.mubr.f32.gmra.mrb[0].mxu0 %v323
    %v476 = vpop.f32.mrb[0].mxu0
    %v477 = vadd.f32 0.0, %v476
    %v478 = vpop.f32.mrb[0].mxu0
    %v479 = vadd.f32 0.0, %v478
    %480 = vdwg.mxu0
    %v481 = vadd.f32 %v335, %v406
    %v482 = vadd.f32 %v336, %v408
    %v483 = vadd.f32 %v337, %v477
    %v484 = vadd.f32 %v338, %v479
    %v485 = vmul.f32 %v481, 0.5
    %v486 = vtanh.pop %v485
    %v487 = vmul.f32 %v486, 0.5
    %v488 = vadd.f32 %v487, 0.5
    %v489 = vmul.f32 %v482, 0.5
    %v490 = vtanh.pop %v489
    %v491 = vmul.f32 %v490, 0.5
    %v492 = vadd.f32 %v491, 0.5
    %v493 = vtanh.pop %v483
    %v494 = vmul.f32 %v484, 0.5
    %v495 = vtanh.pop %v494
    %v496 = vmul.f32 %v495, 0.5
    %v497 = vadd.f32 %v496, 0.5
    %v498 = vmul.f32 %v492, %v321
    %v499 = vmul.f32 %v488, %v493
    %v500 = vadd.f32 %v498, %v499
    %v501 = vtanh.pop %v500
    %v502 = vmul.f32 %v497, %v501
    %s503 = scalar_lea.vmem %s0, 4
    %v504 = vld [vmem:[%s503] sm:$0x3]
    %506 = vset.pattern.permute.xlu0 0
    %507 = vperm.xlu0 %506, %v504
    %v508 = vpop.permute.xlu0 %507
    %v510 = vmul.f32 %v508, %v50
    %v511 = vmul.f32 %v508, %v54
    %v512 = vmul.f32 %v508, %v58
    %v513 = vmul.f32 %v508, %v62
    %v514 = vadd.f32 %v510, %v75
    %v515 = vadd.f32 %v511, %v79
    %v516 = vadd.f32 %v512, %v83
    %v517 = vadd.f32 %v513, %v87
    %518 = vmatprep.subr.mxu0 %v97
    %519 = vmatpush1.msra.mxu0 %v96
    %520 = vmatprep.subr.mxu0 %v101
    %521 = vmatpush1.msra.mxu0 %v100
    %522 = vmatprep.subr.mxu0 %v105
    %523 = vmatpush1.msra.mxu0 %v104
    %524 = vmatprep.subr.mxu0 %v109
    %525 = vmatpush1.msra.mxu0 %v108
    %526 = vmatprep.subr.mxu0 %v113
    %527 = vmatpush1.msra.mxu0 %v112
    %528 = vmatprep.subr.mxu0 %v117
    %529 = vmatpush1.msra.mxu0 %v116
    %530 = vmatprep.subr.mxu0 %v121
    %531 = vmatpush1.msra.mxu0 %v120
    %532 = vmatprep.subr.mxu0 %v125
    %533 = vmatpush1.msra.mxu0 %v124
    %534 = vmatprep.subr.mxu0 %v129
    %535 = vmatpush1.msra.mxu0 %v128
    %536 = vmatprep.subr.mxu0 %v133
    %537 = vmatpush1.msra.mxu0 %v132
    %538 = vmatprep.subr.mxu0 %v137
    %539 = vmatpush1.msra.mxu0 %v136
    %540 = vmatprep.subr.mxu0 %v141
    %541 = vmatpush1.msra.mxu0 %v140
    %542 = vmatprep.subr.mxu0 %v145
    %543 = vmatpush1.msra.mxu0 %v144
    %544 = vmatprep.subr.mxu0 %v149
    %545 = vmatpush1.msra.mxu0 %v148
    %546 = vmatprep.subr.mxu0 %v153
    %547 = vmatpush1.msra.mxu0 %v152
    %548 = vmatprep.subr.mxu0 %v157
    %549 = vmatpush1.msra.mxu0 %v156
    %550 = vmatprep.subr.mxu0 0.0
    %551 = vmatpush1.msra.mxu0 0.0
    %552 = vmatprep.subr.mxu0 0.0
    %553 = vmatpush1.msra.mxu0 0.0
    %554 = vmatprep.subr.mxu0 0.0
    %555 = vmatpush1.msra.mxu0 0.0
    %556 = vmatprep.subr.mxu0 0.0
    %557 = vmatpush1.msra.mxu0 0.0
    %558 = vmatprep.subr.mxu0 0.0
    %559 = vmatpush1.msra.mxu0 0.0
    %560 = vmatprep.subr.mxu0 0.0
    %561 = vmatpush1.msra.mxu0 0.0
    %562 = vmatprep.subr.mxu0 0.0
    %563 = vmatpush1.msra.mxu0 0.0
    %564 = vmatprep.subr.mxu0 0.0
    %565 = vmatpush1.msra.mxu0 0.0
    %566 = vmatprep.subr.mxu0 0.0
    %567 = vmatpush1.msra.mxu0 0.0
    %568 = vmatprep.subr.mxu0 0.0
    %569 = vmatpush1.msra.mxu0 0.0
    %570 = vmatprep.subr.mxu0 0.0
    %571 = vmatpush1.msra.mxu0 0.0
    %572 = vmatprep.subr.mxu0 0.0
    %573 = vmatpush1.msra.mxu0 0.0
    %574 = vmatprep.subr.mxu0 0.0
    %575 = vmatpush1.msra.mxu0 0.0
    %576 = vmatprep.subr.mxu0 0.0
    %577 = vmatpush1.msra.mxu0 0.0
    %578 = vmatprep.subr.mxu0 0.0
    %579 = vmatpush1.msra.mxu0 0.0
    %580 = vmatprep.subr.mxu0 0.0
    %581 = vmatpush1.msra.mxu0 0.0
    %582 = vmatprep.mubr.f32.mxu0 0.0
    %583 = vmatmul.mubr.f32.gmra.mrb[0].mxu0 %v502
    %v584 = vpop.f32.mrb[0].mxu0
    %v585 = vadd.f32 0.0, %v584
    %v586 = vpop.f32.mrb[0].mxu0
    %v587 = vadd.f32 0.0, %v586
    %588 = vdwg.mxu0
    %589 = vmatprep.subr.mxu0 %v99
    %590 = vmatpush1.msra.mxu0 %v98
    %591 = vmatprep.subr.mxu0 %v103
    %592 = vmatpush1.msra.mxu0 %v102
    %593 = vmatprep.subr.mxu0 %v107
    %594 = vmatpush1.msra.mxu0 %v106
    %595 = vmatprep.subr.mxu0 %v111
    %596 = vmatpush1.msra.mxu0 %v110
    %597 = vmatprep.subr.mxu0 %v115
    %598 = vmatpush1.msra.mxu0 %v114
    %599 = vmatprep.subr.mxu0 %v119
    %600 = vmatpush1.msra.mxu0 %v118
    %601 = vmatprep.subr.mxu0 %v123
    %602 = vmatpush1.msra.mxu0 %v122
    %603 = vmatprep.subr.mxu0 %v127
    %604 = vmatpush1.msra.mxu0 %v126
    %605 = vmatprep.subr.mxu0 %v131
    %606 = vmatpush1.msra.mxu0 %v130
    %607 = vmatprep.subr.mxu0 %v135
    %608 = vmatpush1.msra.mxu0 %v134
    %609 = vmatprep.subr.mxu0 %v139
    %610 = vmatpush1.msra.mxu0 %v138
    %611 = vmatprep.subr.mxu0 %v143
    %612 = vmatpush1.msra.mxu0 %v142
    %613 = vmatprep.subr.mxu0 %v147
    %614 = vmatpush1.msra.mxu0 %v146
    %615 = vmatprep.subr.mxu0 %v151
    %616 = vmatpush1.msra.mxu0 %v150
    %617 = vmatprep.subr.mxu0 %v155
    %618 = vmatpush1.msra.mxu0 %v154
    %619 = vmatprep.subr.mxu0 %v159
    %620 = vmatpush1.msra.mxu0 %v158
    %621 = vmatprep.subr.mxu0 0.0
    %622 = vmatpush1.msra.mxu0 0.0
    %623 = vmatprep.subr.mxu0 0.0
    %624 = vmatpush1.msra.mxu0 0.0
    %625 = vmatprep.subr.mxu0 0.0
    %626 = vmatpush1.msra.mxu0 0.0
    %627 = vmatprep.subr.mxu0 0.0
    %628 = vmatpush1.msra.mxu0 0.0
    %629 = vmatprep.subr.mxu0 0.0
    %630 = vmatpush1.msra.mxu0 0.0
    %631 = vmatprep.subr.mxu0 0.0
    %632 = vmatpush1.msra.mxu0 0.0
    %633 = vmatprep.subr.mxu0 0.0
    %634 = vmatpush1.msra.mxu0 0.0
    %635 = vmatprep.subr.mxu0 0.0
    %636 = vmatpush1.msra.mxu0 0.0
    %637 = vmatprep.subr.mxu0 0.0
    %638 = vmatpush1.msra.mxu0 0.0
    %639 = vmatprep.subr.mxu0 0.0
    %640 = vmatpush1.msra.mxu0 0.0
    %641 = vmatprep.subr.mxu0 0.0
    %642 = vmatpush1.msra.mxu0 0.0
    %643 = vmatprep.subr.mxu0 0.0
    %644 = vmatpush1.msra.mxu0 0.0
    %645 = vmatprep.subr.mxu0 0.0
    %646 = vmatpush1.msra.mxu0 0.0
    %647 = vmatprep.subr.mxu0 0.0
    %648 = vmatpush1.msra.mxu0 0.0
    %649 = vmatprep.subr.mxu0 0.0
    %650 = vmatpush1.msra.mxu0 0.0
    %651 = vmatprep.subr.mxu0 0.0
    %652 = vmatpush1.msra.mxu0 0.0
    %653 = vmatprep.mubr.f32.mxu0 0.0
    %654 = vmatmul.mubr.f32.gmra.mrb[0].mxu0 %v502
    %v655 = vpop.f32.mrb[0].mxu0
    %v656 = vadd.f32 0.0, %v655
    %v657 = vpop.f32.mrb[0].mxu0
    %v658 = vadd.f32 0.0, %v657
    %659 = vdwg.mxu0
    %v660 = vadd.f32 %v514, %v585
    %v661 = vadd.f32 %v515, %v587
    %v662 = vadd.f32 %v516, %v656
    %v663 = vadd.f32 %v517, %v658
    %v664 = vmul.f32 %v660, 0.5
    %v665 = vtanh.pop %v664
    %v666 = vmul.f32 %v665, 0.5
    %v667 = vadd.f32 %v666, 0.5
    %v668 = vmul.f32 %v661, 0.5
    %v669 = vtanh.pop %v668
    %v670 = vmul.f32 %v669, 0.5
    %v671 = vadd.f32 %v670, 0.5
    %v672 = vtanh.pop %v662
    %v673 = vmul.f32 %v663, 0.5
    %v674 = vtanh.pop %v673
    %v675 = vmul.f32 %v674, 0.5
    %v676 = vadd.f32 %v675, 0.5
    %v677 = vmul.f32 %v671, %v500
    %v678 = vmul.f32 %v667, %v672
    %v679 = vadd.f32 %v677, %v678
    %v680 = vtanh.pop %v679
    %v681 = vmul.f32 %v676, %v680
    %s682 = scalar_lea.vmem %s0, 6
    %v683 = vld [vmem:[%s682] sm:$0x3]
    %685 = vset.pattern.permute.xlu0 0
    %686 = vperm.xlu0 %685, %v683
    %v687 = vpop.permute.xlu0 %686
    %v689 = vmul.f32 %v687, %v50
    %v690 = vmul.f32 %v687, %v54
    %v691 = vmul.f32 %v687, %v58
    %v692 = vmul.f32 %v687, %v62
    %v693 = vadd.f32 %v689, %v75
    %v694 = vadd.f32 %v690, %v79
    %v695 = vadd.f32 %v691, %v83
    %v696 = vadd.f32 %v692, %v87
    %697 = vmatprep.subr.mxu0 %v97
    %698 = vmatpush1.msra.mxu0 %v96
    %699 = vmatprep.subr.mxu0 %v101
    %700 = vmatpush1.msra.mxu0 %v100
    %701 = vmatprep.subr.mxu0 %v105
    %702 = vmatpush1.msra.mxu0 %v104
    %703 = vmatprep.subr.mxu0 %v109
    %704 = vmatpush1.msra.mxu0 %v108
    %705 = vmatprep.subr.mxu0 %v113
    %706 = vmatpush1.msra.mxu0 %v112
    %707 = vmatprep.subr.mxu0 %v117
    %708 = vmatpush1.msra.mxu0 %v116
    %709 = vmatprep.subr.mxu0 %v121
    %710 = vmatpush1.msra.mxu0 %v120
    %711 = vmatprep.subr.mxu0 %v125
    %712 = vmatpush1.msra.mxu0 %v124
    %713 = vmatprep.subr.mxu0 %v129
    %714 = vmatpush1.msra.mxu0 %v128
    %715 = vmatprep.subr.mxu0 %v133
    %716 = vmatpush1.msra.mxu0 %v132
    %717 = vmatprep.subr.mxu0 %v137
    %718 = vmatpush1.msra.mxu0 %v136
    %719 = vmatprep.subr.mxu0 %v141
    %720 = vmatpush1.msra.mxu0 %v140
    %721 = vmatprep.subr.mxu0 %v145
    %722 = vmatpush1.msra.mxu0 %v144
    %723 = vmatprep.subr.mxu0 %v149
    %724 = vmatpush1.msra.mxu0 %v148
    %725 = vmatprep.subr.mxu0 %v153
    %726 = vmatpush1.msra.mxu0 %v152
    %727 = vmatprep.subr.mxu0 %v157
    %728 = vmatpush1.msra.mxu0 %v156
    %729 = vmatprep.subr.mxu0 0.0
    %730 = vmatpush1.msra.mxu0 0.0
    %731 = vmatprep.subr.mxu0 0.0
    %732 = vmatpush1.msra.mxu0 0.0
    %733 = vmatprep.subr.mxu0 0.0
    %734 = vmatpush1.msra.mxu0 0.0
    %735 = vmatprep.subr.mxu0 0.0
    %736 = vmatpush1.msra.mxu0 0.0
    %737 = vmatprep.subr.mxu0 0.0
    %738 = vmatpush1.msra.mxu0 0.0
    %739 = vmatprep.subr.mxu0 0.0
    %740 = vmatpush1.msra.mxu0 0.0
    %741 = vmatprep.subr.mxu0 0.0
    %742 = vmatpush1.msra.mxu0 0.0
    %743 = vmatprep.subr.mxu0 0.0
    %744 = vmatpush1.msra.mxu0 0.0
    %745 = vmatprep.subr.mxu0 0.0
    %746 = vmatpush1.msra.mxu0 0.0
    %747 = vmatprep.subr.mxu0 0.0
    %748 = vmatpush1.msra.mxu0 0.0
    %749 = vmatprep.subr.mxu0 0.0
    %750 = vmatpush1.msra.mxu0 0.0
    %751 = vmatprep.subr.mxu0 0.0
    %752 = vmatpush1.msra.mxu0 0.0
    %753 = vmatprep.subr.mxu0 0.0
    %754 = vmatpush1.msra.mxu0 0.0
    %755 = vmatprep.subr.mxu0 0.0
    %756 = vmatpush1.msra.mxu0 0.0
    %757 = vmatprep.subr.mxu0 0.0
    %758 = vmatpush1.msra.mxu0 0.0
    %759 = vmatprep.subr.mxu0 0.0
    %760 = vmatpush1.msra.mxu0 0.0
    %761 = vmatprep.mubr.f32.mxu0 0.0
    %762 = vmatmul.mubr.f32.gmra.mrb[0].mxu0 %v681
    %v763 = vpop.f32.mrb[0].mxu0
    %v764 = vadd.f32 0.0, %v763
    %v765 = vpop.f32.mrb[0].mxu0
    %v766 = vadd.f32 0.0, %v765
    %767 = vdwg.mxu0
    %768 = vmatprep.subr.mxu0 %v99
    %769 = vmatpush1.msra.mxu0 %v98
    %770 = vmatprep.subr.mxu0 %v103
    %771 = vmatpush1.msra.mxu0 %v102
    %772 = vmatprep.subr.mxu0 %v107
    %773 = vmatpush1.msra.mxu0 %v106
    %774 = vmatprep.subr.mxu0 %v111
    %775 = vmatpush1.msra.mxu0 %v110
    %776 = vmatprep.subr.mxu0 %v115
    %777 = vmatpush1.msra.mxu0 %v114
    %778 = vmatprep.subr.mxu0 %v119
    %779 = vmatpush1.msra.mxu0 %v118
    %780 = vmatprep.subr.mxu0 %v123
    %781 = vmatpush1.msra.mxu0 %v122
    %782 = vmatprep.subr.mxu0 %v127
    %783 = vmatpush1.msra.mxu0 %v126
    %784 = vmatprep.subr.mxu0 %v131
    %785 = vmatpush1.msra.mxu0 %v130
    %786 = vmatprep.subr.mxu0 %v135
    %787 = vmatpush1.msra.mxu0 %v134
    %788 = vmatprep.subr.mxu0 %v139
    %789 = vmatpush1.msra.mxu0 %v138
    %790 = vmatprep.subr.mxu0 %v143
    %791 = vmatpush1.msra.mxu0 %v142
    %792 = vmatprep.subr.mxu0 %v147
    %793 = vmatpush1.msra.mxu0 %v146
    %794 = vmatprep.subr.mxu0 %v151
    %795 = vmatpush1.msra.mxu0 %v150
    %796 = vmatprep.subr.mxu0 %v155
    %797 = vmatpush1.msra.mxu0 %v154
    %798 = vmatprep.subr.mxu0 %v159
    %799 = vmatpush1.msra.mxu0 %v158
    %800 = vmatprep.subr.mxu0 0.0
    %801 = vmatpush1.msra.mxu0 0.0
    %802 = vmatprep.subr.mxu0 0.0
    %803 = vmatpush1.msra.mxu0 0.0
    %804 = vmatprep.subr.mxu0 0.0
    %805 = vmatpush1.msra.mxu0 0.0
    %806 = vmatprep.subr.mxu0 0.0
    %807 = vmatpush1.msra.mxu0 0.0
    %808 = vmatprep.subr.mxu0 0.0
    %809 = vmatpush1.msra.mxu0 0.0
    %810 = vmatprep.subr.mxu0 0.0
    %811 = vmatpush1.msra.mxu0 0.0
    %812 = vmatprep.subr.mxu0 0.0
    %813 = vmatpush1.msra.mxu0 0.0
    %814 = vmatprep.subr.mxu0 0.0
    %815 = vmatpush1.msra.mxu0 0.0
    %816 = vmatprep.subr.mxu0 0.0
    %817 = vmatpush1.msra.mxu0 0.0
    %818 = vmatprep.subr.mxu0 0.0
    %819 = vmatpush1.msra.mxu0 0.0
    %820 = vmatprep.subr.mxu0 0.0
    %821 = vmatpush1.msra.mxu0 0.0
    %822 = vmatprep.subr.mxu0 0.0
    %823 = vmatpush1.msra.mxu0 0.0
    %824 = vmatprep.subr.mxu0 0.0
    %825 = vmatpush1.msra.mxu0 0.0
    %826 = vmatprep.subr.mxu0 0.0
    %827 = vmatpush1.msra.mxu0 0.0
    %828 = vmatprep.subr.mxu0 0.0
    %829 = vmatpush1.msra.mxu0 0.0
    %830 = vmatprep.subr.mxu0 0.0
    %831 = vmatpush1.msra.mxu0 0.0
    %832 = vmatprep.mubr.f32.mxu0 0.0
    %833 = vmatmul.mubr.f32.gmra.mrb[0].mxu0 %v681
    %v834 = vpop.f32.mrb[0].mxu0
    %v835 = vadd.f32 0.0, %v834
    %v836 = vpop.f32.mrb[0].mxu0
    %v837 = vadd.f32 0.0, %v836
    %838 = vdwg.mxu0
    %v839 = vadd.f32 %v693, %v764
    %v840 = vadd.f32 %v694, %v766
    %v841 = vadd.f32 %v695, %v835
    %v842 = vadd.f32 %v696, %v837
    %v843 = vmul.f32 %v839, 0.5
    %v844 = vtanh.pop %v843
    %v845 = vmul.f32 %v844, 0.5
    %v846 = vadd.f32 %v845, 0.5
    %v847 = vmul.f32 %v840, 0.5
    %v848 = vtanh.pop %v847
    %v849 = vmul.f32 %v848, 0.5
    %v850 = vadd.f32 %v849, 0.5
    %v851 = vtanh.pop %v841
    %v852 = vmul.f32 %v842, 0.5
    %v853 = vtanh.pop %v852
    %v854 = vmul.f32 %v853, 0.5
    %v855 = vadd.f32 %v854, 0.5
    %v856 = vmul.f32 %v850, %v679
    %v857 = vmul.f32 %v846, %v851
    %v858 = vadd.f32 %v856, %v857
    %v859 = vtanh.pop %v858
    %v860 = vmul.f32 %v855, %v859
    %s861 = scalar_lea.vmem %s0, 8
    %v862 = vld [vmem:[%s861] sm:$0x3]
    %864 = vset.pattern.permute.xlu0 0
    %865 = vperm.xlu0 %864, %v862
    %v866 = vpop.permute.xlu0 %865
    %v868 = vmul.f32 %v866, %v50
    %v869 = vmul.f32 %v866, %v54
    %v870 = vmul.f32 %v866, %v58
    %v871 = vmul.f32 %v866, %v62
    %v872 = vadd.f32 %v868, %v75
    %v873 = vadd.f32 %v869, %v79
    %v874 = vadd.f32 %v870, %v83
    %v875 = vadd.f32 %v871, %v87
    %876 = vmatprep.subr.mxu0 %v97
    %877 = vmatpush1.msra.mxu0 %v96
    %878 = vmatprep.subr.mxu0 %v101
    %879 = vmatpush1.msra.mxu0 %v100
    %880 = vmatprep.subr.mxu0 %v105
    %881 = vmatpush1.msra.mxu0 %v104
    %882 = vmatprep.subr.mxu0 %v109
    %883 = vmatpush1.msra.mxu0 %v108
    %884 = vmatprep.subr.mxu0 %v113
    %885 = vmatpush1.msra.mxu0 %v112
    %886 = vmatprep.subr.mxu0 %v117
    %887 = vmatpush1.msra.mxu0 %v116
    %888 = vmatprep.subr.mxu0 %v121
    %889 = vmatpush1.msra.mxu0 %v120
    %890 = vmatprep.subr.mxu0 %v125
    %891 = vmatpush1.msra.mxu0 %v124
    %892 = vmatprep.subr.mxu0 %v129
    %893 = vmatpush1.msra.mxu0 %v128
    %894 = vmatprep.subr.mxu0 %v133
    %895 = vmatpush1.msra.mxu0 %v132
    %896 = vmatprep.subr.mxu0 %v137
    %897 = vmatpush1.msra.mxu0 %v136
    %898 = vmatprep.subr.mxu0 %v141
    %899 = vmatpush1.msra.mxu0 %v140
    %900 = vmatprep.subr.mxu0 %v145
    %901 = vmatpush1.msra.mxu0 %v144
    %902 = vmatprep.subr.mxu0 %v149
    %903 = vmatpush1.msra.mxu0 %v148
    %904 = vmatprep.subr.mxu0 %v153
    %905 = vmatpush1.msra.mxu0 %v152
    %906 = vmatprep.subr.mxu0 %v157
    %907 = vmatpush1.msra.mxu0 %v156
    %908 = vmatprep.subr.mxu0 0.0
    %909 = vmatpush1.msra.mxu0 0.0
    %910 = vmatprep.subr.mxu0 0.0
    %911 = vmatpush1.msra.mxu0 0.0
    %912 = vmatprep.subr.mxu0 0.0
    %913 = vmatpush1.msra.mxu0 0.0
    %914 = vmatprep.subr.mxu0 0.0
    %915 = vmatpush1.msra.mxu0 0.0
    %916 = vmatprep.subr.mxu0 0.0
    %917 = vmatpush1.msra.mxu0 0.0
    %918 = vmatprep.subr.mxu0 0.0
    %919 = vmatpush1.msra.mxu0 0.0
    %920 = vmatprep.subr.mxu0 0.0
    %921 = vmatpush1.msra.mxu0 0.0
    %922 = vmatprep.subr.mxu0 0.0
    %923 = vmatpush1.msra.mxu0 0.0
    %924 = vmatprep.subr.mxu0 0.0
    %925 = vmatpush1.msra.mxu0 0.0
    %926 = vmatprep.subr.mxu0 0.0
    %927 = vmatpush1.msra.mxu0 0.0
    %928 = vmatprep.subr.mxu0 0.0
    %929 = vmatpush1.msra.mxu0 0.0
    %930 = vmatprep.subr.mxu0 0.0
    %931 = vmatpush1.msra.mxu0 0.0
    %932 = vmatprep.subr.mxu0 0.0
    %933 = vmatpush1.msra.mxu0 0.0
    %934 = vmatprep.subr.mxu0 0.0
    %935 = vmatpush1.msra.mxu0 0.0
    %936 = vmatprep.subr.mxu0 0.0
    %937 = vmatpush1.msra.mxu0 0.0
    %938 = vmatprep.subr.mxu0 0.0
    %939 = vmatpush1.msra.mxu0 0.0
    %940 = vmatprep.mubr.f32.mxu0 0.0
    %941 = vmatmul.mubr.f32.gmra.mrb[0].mxu0 %v860
    %v942 = vpop.f32.mrb[0].mxu0
    %v943 = vadd.f32 0.0, %v942
    %v944 = vpop.f32.mrb[0].mxu0
    %v945 = vadd.f32 0.0, %v944
    %946 = vdwg.mxu0
    %947 = vmatprep.subr.mxu0 %v99
    %948 = vmatpush1.msra.mxu0 %v98
    %949 = vmatprep.subr.mxu0 %v103
    %950 = vmatpush1.msra.mxu0 %v102
    %951 = vmatprep.subr.mxu0 %v107
    %952 = vmatpush1.msra.mxu0 %v106
    %953 = vmatprep.subr.mxu0 %v111
    %954 = vmatpush1.msra.mxu0 %v110
    %955 = vmatprep.subr.mxu0 %v115
    %956 = vmatpush1.msra.mxu0 %v114
    %957 = vmatprep.subr.mxu0 %v119
    %958 = vmatpush1.msra.mxu0 %v118
    %959 = vmatprep.subr.mxu0 %v123
    %960 = vmatpush1.msra.mxu0 %v122
    %961 = vmatprep.subr.mxu0 %v127
    %962 = vmatpush1.msra.mxu0 %v126
    %963 = vmatprep.subr.mxu0 %v131
    %964 = vmatpush1.msra.mxu0 %v130
    %965 = vmatprep.subr.mxu0 %v135
    %966 = vmatpush1.msra.mxu0 %v134
    %967 = vmatprep.subr.mxu0 %v139
    %968 = vmatpush1.msra.mxu0 %v138
    %969 = vmatprep.subr.mxu0 %v143
    %970 = vmatpush1.msra.mxu0 %v142
    %971 = vmatprep.subr.mxu0 %v147
    %972 = vmatpush1.msra.mxu0 %v146
    %973 = vmatprep.subr.mxu0 %v151
    %974 = vmatpush1.msra.mxu0 %v150
    %975 = vmatprep.subr.mxu0 %v155
    %976 = vmatpush1.msra.mxu0 %v154
    %977 = vmatprep.subr.mxu0 %v159
    %978 = vmatpush1.msra.mxu0 %v158
    %979 = vmatprep.subr.mxu0 0.0
    %980 = vmatpush1.msra.mxu0 0.0
    %981 = vmatprep.subr.mxu0 0.0
    %982 = vmatpush1.msra.mxu0 0.0
    %983 = vmatprep.subr.mxu0 0.0
    %984 = vmatpush1.msra.mxu0 0.0
    %985 = vmatprep.subr.mxu0 0.0
    %986 = vmatpush1.msra.mxu0 0.0
    %987 = vmatprep.subr.mxu0 0.0
    %988 = vmatpush1.msra.mxu0 0.0
    %989 = vmatprep.subr.mxu0 0.0
    %990 = vmatpush1.msra.mxu0 0.0
    %991 = vmatprep.subr.mxu0 0.0
    %992 = vmatpush1.msra.mxu0 0.0
    %993 = vmatprep.subr.mxu0 0.0
    %994 = vmatpush1.msra.mxu0 0.0
    %995 = vmatprep.subr.mxu0 0.0
    %996 = vmatpush1.msra.mxu0 0.0
    %997 = vmatprep.subr.mxu0 0.0
    %998 = vmatpush1.msra.mxu0 0.0
    %999 = vmatprep.subr.mxu0 0.0
    %1000 = vmatpush1.msra.mxu0 0.0
    %1001 = vmatprep.subr.mxu0 0.0
    %1002 = vmatpush1.msra.mxu0 0.0
    %1003 = vmatprep.subr.mxu0 0.0
    %1004 = vmatpush1.msra.mxu0 0.0
    %1005 = vmatprep.subr.mxu0 0.0
    %1006 = vmatpush1.msra.mxu0 0.0
    %1007 = vmatprep.subr.mxu0 0.0
    %1008 = vmatpush1.msra.mxu0 0.0
    %1009 = vmatprep.subr.mxu0 0.0
    %1010 = vmatpush1.msra.mxu0 0.0
    %1011 = vmatprep.mubr.f32.mxu0 0.0
    %1012 = vmatmul.mubr.f32.gmra.mrb[0].mxu0 %v860
    %v1013 = vpop.f32.mrb[0].mxu0
    %v1014 = vadd.f32 0.0, %v1013
    %v1015 = vpop.f32.mrb[0].mxu0
    %v1016 = vadd.f32 0.0, %v1015
    %1017 = vdwg.mxu0
    %v1018 = vadd.f32 %v872, %v943
    %v1019 = vadd.f32 %v873, %v945
    %v1020 = vadd.f32 %v874, %v1014
    %v1021 = vadd.f32 %v875, %v1016
    %v1022 = vmul.f32 %v1018, 0.5
    %v1023 = vtanh.pop %v1022
    %v1024 = vmul.f32 %v1023, 0.5
    %v1025 = vadd.f32 %v1024, 0.5
    %v1026 = vmul.f32 %v1019, 0.5
    %v1027 = vtanh.pop %v1026
    %v1028 = vmul.f32 %v1027, 0.5
    %v1029 = vadd.f32 %v1028, 0.5
    %v1030 = vtanh.pop %v1020
    %v1031 = vmul.f32 %v1021, 0.5
    %v1032 = vtanh.pop %v1031
    %v1033 = vmul.f32 %v1032, 0.5
    %v1034 = vadd.f32 %v1033, 0.5
    %v1035 = vmul.f32 %v1029, %v858
    %v1036 = vmul.f32 %v1025, %v1030
    %v1037 = vadd.f32 %v1035, %v1036
    %v1038 = vtanh.pop %v1037
    %v1039 = vmul.f32 %v1034, %v1038
    %s1040 = scalar_lea.vmem %s0, 10
    %v1041 = vld [vmem:[%s1040] sm:$0x3]
    %1043 = vset.pattern.permute.xlu0 0
    %1044 = vperm.xlu0 %1043, %v1041
    %v1045 = vpop.permute.xlu0 %1044
    %v1047 = vmul.f32 %v1045, %v50
    %v1048 = vmul.f32 %v1045, %v54
    %v1049 = vmul.f32 %v1045, %v58
    %v1050 = vmul.f32 %v1045, %v62
    %v1051 = vadd.f32 %v1047, %v75
    %v1052 = vadd.f32 %v1048, %v79
    %v1053 = vadd.f32 %v1049, %v83
    %v1054 = vadd.f32 %v1050, %v87
    %1055 = vmatprep.subr.mxu0 %v97
    %1056 = vmatpush1.msra.mxu0 %v96
    %1057 = vmatprep.subr.mxu0 %v101
    %1058 = vmatpush1.msra.mxu0 %v100
    %1059 = vmatprep.subr.mxu0 %v105
    %1060 = vmatpush1.msra.mxu0 %v104
    %1061 = vmatprep.subr.mxu0 %v109
    %1062 = vmatpush1.msra.mxu0 %v108
    %1063 = vmatprep.subr.mxu0 %v113
    %1064 = vmatpush1.msra.mxu0 %v112
    %1065 = vmatprep.subr.mxu0 %v117
    %1066 = vmatpush1.msra.mxu0 %v116
    %1067 = vmatprep.subr.mxu0 %v121
    %1068 = vmatpush1.msra.mxu0 %v120
    %1069 = vmatprep.subr.mxu0 %v125
    %1070 = vmatpush1.msra.mxu0 %v124
    %1071 = vmatprep.subr.mxu0 %v129
    %1072 = vmatpush1.msra.mxu0 %v128
    %1073 = vmatprep.subr.mxu0 %v133
    %1074 = vmatpush1.msra.mxu0 %v132
    %1075 = vmatprep.subr.mxu0 %v137
    %1076 = vmatpush1.msra.mxu0 %v136
    %1077 = vmatprep.subr.mxu0 %v141
    %1078 = vmatpush1.msra.mxu0 %v140
    %1079 = vmatprep.subr.mxu0 %v145
    %1080 = vmatpush1.msra.mxu0 %v144
    %1081 = vmatprep.subr.mxu0 %v149
    %1082 = vmatpush1.msra.mxu0 %v148
    %1083 = vmatprep.subr.mxu0 %v153
    %1084 = vmatpush1.msra.mxu0 %v152
    %1085 = vmatprep.subr.mxu0 %v157
    %1086 = vmatpush1.msra.mxu0 %v156
    %1087 = vmatprep.subr.mxu0 0.0
    %1088 = vmatpush1.msra.mxu0 0.0
    %1089 = vmatprep.subr.mxu0 0.0
    %1090 = vmatpush1.msra.mxu0 0.0
    %1091 = vmatprep.subr.mxu0 0.0
    %1092 = vmatpush1.msra.mxu0 0.0
    %1093 = vmatprep.subr.mxu0 0.0
    %1094 = vmatpush1.msra.mxu0 0.0
    %1095 = vmatprep.subr.mxu0 0.0
    %1096 = vmatpush1.msra.mxu0 0.0
    %1097 = vmatprep.subr.mxu0 0.0
    %1098 = vmatpush1.msra.mxu0 0.0
    %1099 = vmatprep.subr.mxu0 0.0
    %1100 = vmatpush1.msra.mxu0 0.0
    %1101 = vmatprep.subr.mxu0 0.0
    %1102 = vmatpush1.msra.mxu0 0.0
    %1103 = vmatprep.subr.mxu0 0.0
    %1104 = vmatpush1.msra.mxu0 0.0
    %1105 = vmatprep.subr.mxu0 0.0
    %1106 = vmatpush1.msra.mxu0 0.0
    %1107 = vmatprep.subr.mxu0 0.0
    %1108 = vmatpush1.msra.mxu0 0.0
    %1109 = vmatprep.subr.mxu0 0.0
    %1110 = vmatpush1.msra.mxu0 0.0
    %1111 = vmatprep.subr.mxu0 0.0
    %1112 = vmatpush1.msra.mxu0 0.0
    %1113 = vmatprep.subr.mxu0 0.0
    %1114 = vmatpush1.msra.mxu0 0.0
    %1115 = vmatprep.subr.mxu0 0.0
    %1116 = vmatpush1.msra.mxu0 0.0
    %1117 = vmatprep.subr.mxu0 0.0
    %1118 = vmatpush1.msra.mxu0 0.0
    %1119 = vmatprep.mubr.f32.mxu0 0.0
    %1120 = vmatmul.mubr.f32.gmra.mrb[0].mxu0 %v1039
    %v1121 = vpop.f32.mrb[0].mxu0
    %v1122 = vadd.f32 0.0, %v1121
    %v1123 = vpop.f32.mrb[0].mxu0
    %v1124 = vadd.f32 0.0, %v1123
    %1125 = vdwg.mxu0
    %1126 = vmatprep.subr.mxu0 %v99
    %1127 = vmatpush1.msra.mxu0 %v98
    %1128 = vmatprep.subr.mxu0 %v103
    %1129 = vmatpush1.msra.mxu0 %v102
    %1130 = vmatprep.subr.mxu0 %v107
    %1131 = vmatpush1.msra.mxu0 %v106
    %1132 = vmatprep.subr.mxu0 %v111
    %1133 = vmatpush1.msra.mxu0 %v110
    %1134 = vmatprep.subr.mxu0 %v115
    %1135 = vmatpush1.msra.mxu0 %v114
    %1136 = vmatprep.subr.mxu0 %v119
    %1137 = vmatpush1.msra.mxu0 %v118
    %1138 = vmatprep.subr.mxu0 %v123
    %1139 = vmatpush1.msra.mxu0 %v122
    %1140 = vmatprep.subr.mxu0 %v127
    %1141 = vmatpush1.msra.mxu0 %v126
    %1142 = vmatprep.subr.mxu0 %v131
    %1143 = vmatpush1.msra.mxu0 %v130
    %1144 = vmatprep.subr.mxu0 %v135
    %1145 = vmatpush1.msra.mxu0 %v134
    %1146 = vmatprep.subr.mxu0 %v139
    %1147 = vmatpush1.msra.mxu0 %v138
    %1148 = vmatprep.subr.mxu0 %v143
    %1149 = vmatpush1.msra.mxu0 %v142
    %1150 = vmatprep.subr.mxu0 %v147
    %1151 = vmatpush1.msra.mxu0 %v146
    %1152 = vmatprep.subr.mxu0 %v151
    %1153 = vmatpush1.msra.mxu0 %v150
    %1154 = vmatprep.subr.mxu0 %v155
    %1155 = vmatpush1.msra.mxu0 %v154
    %1156 = vmatprep.subr.mxu0 %v159
    %1157 = vmatpush1.msra.mxu0 %v158
    %1158 = vmatprep.subr.mxu0 0.0
    %1159 = vmatpush1.msra.mxu0 0.0
    %1160 = vmatprep.subr.mxu0 0.0
    %1161 = vmatpush1.msra.mxu0 0.0
    %1162 = vmatprep.subr.mxu0 0.0
    %1163 = vmatpush1.msra.mxu0 0.0
    %1164 = vmatprep.subr.mxu0 0.0
    %1165 = vmatpush1.msra.mxu0 0.0
    %1166 = vmatprep.subr.mxu0 0.0
    %1167 = vmatpush1.msra.mxu0 0.0
    %1168 = vmatprep.subr.mxu0 0.0
    %1169 = vmatpush1.msra.mxu0 0.0
    %1170 = vmatprep.subr.mxu0 0.0
    %1171 = vmatpush1.msra.mxu0 0.0
    %1172 = vmatprep.subr.mxu0 0.0
    %1173 = vmatpush1.msra.mxu0 0.0
    %1174 = vmatprep.subr.mxu0 0.0
    %1175 = vmatpush1.msra.mxu0 0.0
    %1176 = vmatprep.subr.mxu0 0.0
    %1177 = vmatpush1.msra.mxu0 0.0
    %1178 = vmatprep.subr.mxu0 0.0
    %1179 = vmatpush1.msra.mxu0 0.0
    %1180 = vmatprep.subr.mxu0 0.0
    %1181 = vmatpush1.msra.mxu0 0.0
    %1182 = vmatprep.subr.mxu0 0.0
    %1183 = vmatpush1.msra.mxu0 0.0
    %1184 = vmatprep.subr.mxu0 0.0
    %1185 = vmatpush1.msra.mxu0 0.0
    %1186 = vmatprep.subr.mxu0 0.0
    %1187 = vmatpush1.msra.mxu0 0.0
    %1188 = vmatprep.subr.mxu0 0.0
    %1189 = vmatpush1.msra.mxu0 0.0
    %1190 = vmatprep.mubr.f32.mxu0 0.0
    %1191 = vmatmul.mubr.f32.gmra.mrb[0].mxu0 %v1039
    %v1192 = vpop.f32.mrb[0].mxu0
    %v1193 = vadd.f32 0.0, %v1192
    %v1194 = vpop.f32.mrb[0].mxu0
    %v1195 = vadd.f32 0.0, %v1194
    %1196 = vdwg.mxu0
    %v1197 = vadd.f32 %v1051, %v1122
    %v1198 = vadd.f32 %v1052, %v1124
    %v1199 = vadd.f32 %v1053, %v1193
    %v1200 = vadd.f32 %v1054, %v1195
    %v1201 = vmul.f32 %v1197, 0.5
    %v1202 = vtanh.pop %v1201
    %v1203 = vmul.f32 %v1202, 0.5
    %v1204 = vadd.f32 %v1203, 0.5
    %v1205 = vmul.f32 %v1198, 0.5
    %v1206 = vtanh.pop %v1205
    %v1207 = vmul.f32 %v1206, 0.5
    %v1208 = vadd.f32 %v1207, 0.5
    %v1209 = vtanh.pop %v1199
    %v1210 = vmul.f32 %v1200, 0.5
    %v1211 = vtanh.pop %v1210
    %v1212 = vmul.f32 %v1211, 0.5
    %v1213 = vadd.f32 %v1212, 0.5
    %v1214 = vmul.f32 %v1208, %v1037
    %v1215 = vmul.f32 %v1204, %v1209
    %v1216 = vadd.f32 %v1214, %v1215
    %v1217 = vtanh.pop %v1216
    %v1218 = vmul.f32 %v1213, %v1217
    %s1219 = scalar_lea.vmem %s0, 12
    %v1220 = vld [vmem:[%s1219] sm:$0x3]
    %1222 = vset.pattern.permute.xlu0 0
    %1223 = vperm.xlu0 %1222, %v1220
    %v1224 = vpop.permute.xlu0 %1223
    %v1226 = vmul.f32 %v1224, %v50
    %v1227 = vmul.f32 %v1224, %v54
    %v1228 = vmul.f32 %v1224, %v58
    %v1229 = vmul.f32 %v1224, %v62
    %v1230 = vadd.f32 %v1226, %v75
    %v1231 = vadd.f32 %v1227, %v79
    %v1232 = vadd.f32 %v1228, %v83
    %v1233 = vadd.f32 %v1229, %v87
    %1234 = vmatprep.subr.mxu0 %v97
    %1235 = vmatpush1.msra.mxu0 %v96
    %1236 = vmatprep.subr.mxu0 %v101
    %1237 = vmatpush1.msra.mxu0 %v100
    %1238 = vmatprep.subr.mxu0 %v105
    %1239 = vmatpush1.msra.mxu0 %v104
    %1240 = vmatprep.subr.mxu0 %v109
    %1241 = vmatpush1.msra.mxu0 %v108
    %1242 = vmatprep.subr.mxu0 %v113
    %1243 = vmatpush1.msra.mxu0 %v112
    %1244 = vmatprep.subr.mxu0 %v117
    %1245 = vmatpush1.msra.mxu0 %v116
    %1246 = vmatprep.subr.mxu0 %v121
    %1247 = vmatpush1.msra.mxu0 %v120
    %1248 = vmatprep.subr.mxu0 %v125
    %1249 = vmatpush1.msra.mxu0 %v124
    %1250 = vmatprep.subr.mxu0 %v129
    %1251 = vmatpush1.msra.mxu0 %v128
    %1252 = vmatprep.subr.mxu0 %v133
    %1253 = vmatpush1.msra.mxu0 %v132
    %1254 = vmatprep.subr.mxu0 %v137
    %1255 = vmatpush1.msra.mxu0 %v136
    %1256 = vmatprep.subr.mxu0 %v141
    %1257 = vmatpush1.msra.mxu0 %v140
    %1258 = vmatprep.subr.mxu0 %v145
    %1259 = vmatpush1.msra.mxu0 %v144
    %1260 = vmatprep.subr.mxu0 %v149
    %1261 = vmatpush1.msra.mxu0 %v148
    %1262 = vmatprep.subr.mxu0 %v153
    %1263 = vmatpush1.msra.mxu0 %v152
    %1264 = vmatprep.subr.mxu0 %v157
    %1265 = vmatpush1.msra.mxu0 %v156
    %1266 = vmatprep.subr.mxu0 0.0
    %1267 = vmatpush1.msra.mxu0 0.0
    %1268 = vmatprep.subr.mxu0 0.0
    %1269 = vmatpush1.msra.mxu0 0.0
    %1270 = vmatprep.subr.mxu0 0.0
    %1271 = vmatpush1.msra.mxu0 0.0
    %1272 = vmatprep.subr.mxu0 0.0
    %1273 = vmatpush1.msra.mxu0 0.0
    %1274 = vmatprep.subr.mxu0 0.0
    %1275 = vmatpush1.msra.mxu0 0.0
    %1276 = vmatprep.subr.mxu0 0.0
    %1277 = vmatpush1.msra.mxu0 0.0
    %1278 = vmatprep.subr.mxu0 0.0
    %1279 = vmatpush1.msra.mxu0 0.0
    %1280 = vmatprep.subr.mxu0 0.0
    %1281 = vmatpush1.msra.mxu0 0.0
    %1282 = vmatprep.subr.mxu0 0.0
    %1283 = vmatpush1.msra.mxu0 0.0
    %1284 = vmatprep.subr.mxu0 0.0
    %1285 = vmatpush1.msra.mxu0 0.0
    %1286 = vmatprep.subr.mxu0 0.0
    %1287 = vmatpush1.msra.mxu0 0.0
    %1288 = vmatprep.subr.mxu0 0.0
    %1289 = vmatpush1.msra.mxu0 0.0
    %1290 = vmatprep.subr.mxu0 0.0
    %1291 = vmatpush1.msra.mxu0 0.0
    %1292 = vmatprep.subr.mxu0 0.0
    %1293 = vmatpush1.msra.mxu0 0.0
    %1294 = vmatprep.subr.mxu0 0.0
    %1295 = vmatpush1.msra.mxu0 0.0
    %1296 = vmatprep.subr.mxu0 0.0
    %1297 = vmatpush1.msra.mxu0 0.0
    %1298 = vmatprep.mubr.f32.mxu0 0.0
    %1299 = vmatmul.mubr.f32.gmra.mrb[0].mxu0 %v1218
    %v1300 = vpop.f32.mrb[0].mxu0
    %v1301 = vadd.f32 0.0, %v1300
    %v1302 = vpop.f32.mrb[0].mxu0
    %v1303 = vadd.f32 0.0, %v1302
    %1304 = vdwg.mxu0
    %1305 = vmatprep.subr.mxu0 %v99
    %1306 = vmatpush1.msra.mxu0 %v98
    %1307 = vmatprep.subr.mxu0 %v103
    %1308 = vmatpush1.msra.mxu0 %v102
    %1309 = vmatprep.subr.mxu0 %v107
    %1310 = vmatpush1.msra.mxu0 %v106
    %1311 = vmatprep.subr.mxu0 %v111
    %1312 = vmatpush1.msra.mxu0 %v110
    %1313 = vmatprep.subr.mxu0 %v115
    %1314 = vmatpush1.msra.mxu0 %v114
    %1315 = vmatprep.subr.mxu0 %v119
    %1316 = vmatpush1.msra.mxu0 %v118
    %1317 = vmatprep.subr.mxu0 %v123
    %1318 = vmatpush1.msra.mxu0 %v122
    %1319 = vmatprep.subr.mxu0 %v127
    %1320 = vmatpush1.msra.mxu0 %v126
    %1321 = vmatprep.subr.mxu0 %v131
    %1322 = vmatpush1.msra.mxu0 %v130
    %1323 = vmatprep.subr.mxu0 %v135
    %1324 = vmatpush1.msra.mxu0 %v134
    %1325 = vmatprep.subr.mxu0 %v139
    %1326 = vmatpush1.msra.mxu0 %v138
    %1327 = vmatprep.subr.mxu0 %v143
    %1328 = vmatpush1.msra.mxu0 %v142
    %1329 = vmatprep.subr.mxu0 %v147
    %1330 = vmatpush1.msra.mxu0 %v146
    %1331 = vmatprep.subr.mxu0 %v151
    %1332 = vmatpush1.msra.mxu0 %v150
    %1333 = vmatprep.subr.mxu0 %v155
    %1334 = vmatpush1.msra.mxu0 %v154
    %1335 = vmatprep.subr.mxu0 %v159
    %1336 = vmatpush1.msra.mxu0 %v158
    %1337 = vmatprep.subr.mxu0 0.0
    %1338 = vmatpush1.msra.mxu0 0.0
    %1339 = vmatprep.subr.mxu0 0.0
    %1340 = vmatpush1.msra.mxu0 0.0
    %1341 = vmatprep.subr.mxu0 0.0
    %1342 = vmatpush1.msra.mxu0 0.0
    %1343 = vmatprep.subr.mxu0 0.0
    %1344 = vmatpush1.msra.mxu0 0.0
    %1345 = vmatprep.subr.mxu0 0.0
    %1346 = vmatpush1.msra.mxu0 0.0
    %1347 = vmatprep.subr.mxu0 0.0
    %1348 = vmatpush1.msra.mxu0 0.0
    %1349 = vmatprep.subr.mxu0 0.0
    %1350 = vmatpush1.msra.mxu0 0.0
    %1351 = vmatprep.subr.mxu0 0.0
    %1352 = vmatpush1.msra.mxu0 0.0
    %1353 = vmatprep.subr.mxu0 0.0
    %1354 = vmatpush1.msra.mxu0 0.0
    %1355 = vmatprep.subr.mxu0 0.0
    %1356 = vmatpush1.msra.mxu0 0.0
    %1357 = vmatprep.subr.mxu0 0.0
    %1358 = vmatpush1.msra.mxu0 0.0
    %1359 = vmatprep.subr.mxu0 0.0
    %1360 = vmatpush1.msra.mxu0 0.0
    %1361 = vmatprep.subr.mxu0 0.0
    %1362 = vmatpush1.msra.mxu0 0.0
    %1363 = vmatprep.subr.mxu0 0.0
    %1364 = vmatpush1.msra.mxu0 0.0
    %1365 = vmatprep.subr.mxu0 0.0
    %1366 = vmatpush1.msra.mxu0 0.0
    %1367 = vmatprep.subr.mxu0 0.0
    %1368 = vmatpush1.msra.mxu0 0.0
    %1369 = vmatprep.mubr.f32.mxu0 0.0
    %1370 = vmatmul.mubr.f32.gmra.mrb[0].mxu0 %v1218
    %v1371 = vpop.f32.mrb[0].mxu0
    %v1372 = vadd.f32 0.0, %v1371
    %v1373 = vpop.f32.mrb[0].mxu0
    %v1374 = vadd.f32 0.0, %v1373
    %1375 = vdwg.mxu0
    %v1376 = vadd.f32 %v1230, %v1301
    %v1377 = vadd.f32 %v1231, %v1303
    %v1378 = vadd.f32 %v1232, %v1372
    %v1379 = vadd.f32 %v1233, %v1374
    %v1380 = vmul.f32 %v1376, 0.5
    %v1381 = vtanh.pop %v1380
    %v1382 = vmul.f32 %v1381, 0.5
    %v1383 = vadd.f32 %v1382, 0.5
    %v1384 = vmul.f32 %v1377, 0.5
    %v1385 = vtanh.pop %v1384
    %v1386 = vmul.f32 %v1385, 0.5
    %v1387 = vadd.f32 %v1386, 0.5
    %v1388 = vtanh.pop %v1378
    %v1389 = vmul.f32 %v1379, 0.5
    %v1390 = vtanh.pop %v1389
    %v1391 = vmul.f32 %v1390, 0.5
    %v1392 = vadd.f32 %v1391, 0.5
    %v1393 = vmul.f32 %v1387, %v1216
    %v1394 = vmul.f32 %v1383, %v1388
    %v1395 = vadd.f32 %v1393, %v1394
    %v1396 = vtanh.pop %v1395
    %v1397 = vmul.f32 %v1392, %v1396
    %s1398 = scalar_lea.vmem %s0, 14
    %v1399 = vld [vmem:[%s1398] sm:$0x3]
    %1401 = vset.pattern.permute.xlu0 0
    %1402 = vperm.xlu0 %1401, %v1399
    %v1403 = vpop.permute.xlu0 %1402
    %v1405 = vmul.f32 %v1403, %v50
    %v1406 = vmul.f32 %v1403, %v54
    %v1407 = vmul.f32 %v1403, %v58
    %v1408 = vmul.f32 %v1403, %v62
    %v1409 = vadd.f32 %v1405, %v75
    %v1410 = vadd.f32 %v1406, %v79
    %v1411 = vadd.f32 %v1407, %v83
    %v1412 = vadd.f32 %v1408, %v87
    %1413 = vmatprep.subr.mxu0 %v97
    %1414 = vmatpush1.msra.mxu0 %v96
    %1415 = vmatprep.subr.mxu0 %v101
    %1416 = vmatpush1.msra.mxu0 %v100
    %1417 = vmatprep.subr.mxu0 %v105
    %1418 = vmatpush1.msra.mxu0 %v104
    %1419 = vmatprep.subr.mxu0 %v109
    %1420 = vmatpush1.msra.mxu0 %v108
    %1421 = vmatprep.subr.mxu0 %v113
    %1422 = vmatpush1.msra.mxu0 %v112
    %1423 = vmatprep.subr.mxu0 %v117
    %1424 = vmatpush1.msra.mxu0 %v116
    %1425 = vmatprep.subr.mxu0 %v121
    %1426 = vmatpush1.msra.mxu0 %v120
    %1427 = vmatprep.subr.mxu0 %v125
    %1428 = vmatpush1.msra.mxu0 %v124
    %1429 = vmatprep.subr.mxu0 %v129
    %1430 = vmatpush1.msra.mxu0 %v128
    %1431 = vmatprep.subr.mxu0 %v133
    %1432 = vmatpush1.msra.mxu0 %v132
    %1433 = vmatprep.subr.mxu0 %v137
    %1434 = vmatpush1.msra.mxu0 %v136
    %1435 = vmatprep.subr.mxu0 %v141
    %1436 = vmatpush1.msra.mxu0 %v140
    %1437 = vmatprep.subr.mxu0 %v145
    %1438 = vmatpush1.msra.mxu0 %v144
    %1439 = vmatprep.subr.mxu0 %v149
    %1440 = vmatpush1.msra.mxu0 %v148
    %1441 = vmatprep.subr.mxu0 %v153
    %1442 = vmatpush1.msra.mxu0 %v152
    %1443 = vmatprep.subr.mxu0 %v157
    %1444 = vmatpush1.msra.mxu0 %v156
    %1445 = vmatprep.subr.mxu0 0.0
    %1446 = vmatpush1.msra.mxu0 0.0
    %1447 = vmatprep.subr.mxu0 0.0
    %1448 = vmatpush1.msra.mxu0 0.0
    %1449 = vmatprep.subr.mxu0 0.0
    %1450 = vmatpush1.msra.mxu0 0.0
    %1451 = vmatprep.subr.mxu0 0.0
    %1452 = vmatpush1.msra.mxu0 0.0
    %1453 = vmatprep.subr.mxu0 0.0
    %1454 = vmatpush1.msra.mxu0 0.0
    %1455 = vmatprep.subr.mxu0 0.0
    %1456 = vmatpush1.msra.mxu0 0.0
    %1457 = vmatprep.subr.mxu0 0.0
    %1458 = vmatpush1.msra.mxu0 0.0
    %1459 = vmatprep.subr.mxu0 0.0
    %1460 = vmatpush1.msra.mxu0 0.0
    %1461 = vmatprep.subr.mxu0 0.0
    %1462 = vmatpush1.msra.mxu0 0.0
    %1463 = vmatprep.subr.mxu0 0.0
    %1464 = vmatpush1.msra.mxu0 0.0
    %1465 = vmatprep.subr.mxu0 0.0
    %1466 = vmatpush1.msra.mxu0 0.0
    %1467 = vmatprep.subr.mxu0 0.0
    %1468 = vmatpush1.msra.mxu0 0.0
    %1469 = vmatprep.subr.mxu0 0.0
    %1470 = vmatpush1.msra.mxu0 0.0
    %1471 = vmatprep.subr.mxu0 0.0
    %1472 = vmatpush1.msra.mxu0 0.0
    %1473 = vmatprep.subr.mxu0 0.0
    %1474 = vmatpush1.msra.mxu0 0.0
    %1475 = vmatprep.subr.mxu0 0.0
    %1476 = vmatpush1.msra.mxu0 0.0
    %1477 = vmatprep.mubr.f32.mxu0 0.0
    %1478 = vmatmul.mubr.f32.gmra.mrb[0].mxu0 %v1397
    %v1479 = vpop.f32.mrb[0].mxu0
    %v1480 = vadd.f32 0.0, %v1479
    %v1481 = vpop.f32.mrb[0].mxu0
    %v1482 = vadd.f32 0.0, %v1481
    %1483 = vdwg.mxu0
    %1484 = vmatprep.subr.mxu0 %v99
    %1485 = vmatpush1.msra.mxu0 %v98
    %1486 = vmatprep.subr.mxu0 %v103
    %1487 = vmatpush1.msra.mxu0 %v102
    %1488 = vmatprep.subr.mxu0 %v107
    %1489 = vmatpush1.msra.mxu0 %v106
    %1490 = vmatprep.subr.mxu0 %v111
    %1491 = vmatpush1.msra.mxu0 %v110
    %1492 = vmatprep.subr.mxu0 %v115
    %1493 = vmatpush1.msra.mxu0 %v114
    %1494 = vmatprep.subr.mxu0 %v119
    %1495 = vmatpush1.msra.mxu0 %v118
    %1496 = vmatprep.subr.mxu0 %v123
    %1497 = vmatpush1.msra.mxu0 %v122
    %1498 = vmatprep.subr.mxu0 %v127
    %1499 = vmatpush1.msra.mxu0 %v126
    %1500 = vmatprep.subr.mxu0 %v131
    %1501 = vmatpush1.msra.mxu0 %v130
    %1502 = vmatprep.subr.mxu0 %v135
    %1503 = vmatpush1.msra.mxu0 %v134
    %1504 = vmatprep.subr.mxu0 %v139
    %1505 = vmatpush1.msra.mxu0 %v138
    %1506 = vmatprep.subr.mxu0 %v143
    %1507 = vmatpush1.msra.mxu0 %v142
    %1508 = vmatprep.subr.mxu0 %v147
    %1509 = vmatpush1.msra.mxu0 %v146
    %1510 = vmatprep.subr.mxu0 %v151
    %1511 = vmatpush1.msra.mxu0 %v150
    %1512 = vmatprep.subr.mxu0 %v155
    %1513 = vmatpush1.msra.mxu0 %v154
    %1514 = vmatprep.subr.mxu0 %v159
    %1515 = vmatpush1.msra.mxu0 %v158
    %1516 = vmatprep.subr.mxu0 0.0
    %1517 = vmatpush1.msra.mxu0 0.0
    %1518 = vmatprep.subr.mxu0 0.0
    %1519 = vmatpush1.msra.mxu0 0.0
    %1520 = vmatprep.subr.mxu0 0.0
    %1521 = vmatpush1.msra.mxu0 0.0
    %1522 = vmatprep.subr.mxu0 0.0
    %1523 = vmatpush1.msra.mxu0 0.0
    %1524 = vmatprep.subr.mxu0 0.0
    %1525 = vmatpush1.msra.mxu0 0.0
    %1526 = vmatprep.subr.mxu0 0.0
    %1527 = vmatpush1.msra.mxu0 0.0
    %1528 = vmatprep.subr.mxu0 0.0
    %1529 = vmatpush1.msra.mxu0 0.0
    %1530 = vmatprep.subr.mxu0 0.0
    %1531 = vmatpush1.msra.mxu0 0.0
    %1532 = vmatprep.subr.mxu0 0.0
    %1533 = vmatpush1.msra.mxu0 0.0
    %1534 = vmatprep.subr.mxu0 0.0
    %1535 = vmatpush1.msra.mxu0 0.0
    %1536 = vmatprep.subr.mxu0 0.0
    %1537 = vmatpush1.msra.mxu0 0.0
    %1538 = vmatprep.subr.mxu0 0.0
    %1539 = vmatpush1.msra.mxu0 0.0
    %1540 = vmatprep.subr.mxu0 0.0
    %1541 = vmatpush1.msra.mxu0 0.0
    %1542 = vmatprep.subr.mxu0 0.0
    %1543 = vmatpush1.msra.mxu0 0.0
    %1544 = vmatprep.subr.mxu0 0.0
    %1545 = vmatpush1.msra.mxu0 0.0
    %1546 = vmatprep.subr.mxu0 0.0
    %1547 = vmatpush1.msra.mxu0 0.0
    %1548 = vmatprep.mubr.f32.mxu0 0.0
    %1549 = vmatmul.mubr.f32.gmra.mrb[0].mxu0 %v1397
    %v1550 = vpop.f32.mrb[0].mxu0
    %v1551 = vadd.f32 0.0, %v1550
    %v1552 = vpop.f32.mrb[0].mxu0
    %v1553 = vadd.f32 0.0, %v1552
    %1554 = vdwg.mxu0
    %v1555 = vadd.f32 %v1409, %v1480
    %v1556 = vadd.f32 %v1410, %v1482
    %v1557 = vadd.f32 %v1411, %v1551
    %v1558 = vadd.f32 %v1412, %v1553
    %v1559 = vmul.f32 %v1555, 0.5
    %v1560 = vtanh.pop %v1559
    %v1561 = vmul.f32 %v1560, 0.5
    %v1562 = vadd.f32 %v1561, 0.5
    %v1563 = vmul.f32 %v1556, 0.5
    %v1564 = vtanh.pop %v1563
    %v1565 = vmul.f32 %v1564, 0.5
    %v1566 = vadd.f32 %v1565, 0.5
    %v1567 = vtanh.pop %v1557
    %v1568 = vmul.f32 %v1558, 0.5
    %v1569 = vtanh.pop %v1568
    %v1570 = vmul.f32 %v1569, 0.5
    %v1571 = vadd.f32 %v1570, 0.5
    %v1572 = vmul.f32 %v1566, %v1395
    %v1573 = vmul.f32 %v1562, %v1567
    %v1574 = vadd.f32 %v1572, %v1573
    %v1575 = vtanh.pop %v1574
    %v1576 = vmul.f32 %v1571, %v1575
    %v1577 = vld [vmem:[%s4] sm:$0xff]
    %v1578 = vld [vmem:[%s4 + $0x8] sm:$0xff]
    %v1579 = vld [vmem:[%s4 + $0x10] sm:$0xff]
    %v1580 = vld [vmem:[%s4 + $0x18] sm:$0xff]
    %v1581 = vld [vmem:[%s4 + $0x20] sm:$0xff]
    %v1582 = vld [vmem:[%s4 + $0x28] sm:$0xff]
    %v1583 = vld [vmem:[%s4 + $0x30] sm:$0xff]
    %v1584 = vld [vmem:[%s4 + $0x38] sm:$0xff]
    %v1585 = vld [vmem:[%s4 + $0x40] sm:$0xff]
    %v1586 = vld [vmem:[%s4 + $0x48] sm:$0xff]
    %v1587 = vld [vmem:[%s4 + $0x50] sm:$0xff]
    %v1588 = vld [vmem:[%s4 + $0x58] sm:$0xff]
    %v1589 = vld [vmem:[%s4 + $0x60] sm:$0xff]
    %v1590 = vld [vmem:[%s4 + $0x68] sm:$0xff]
    %v1591 = vld [vmem:[%s4 + $0x70] sm:$0xff]
    %v1592 = vld [vmem:[%s4 + $0x78] sm:$0xff]
    %s1593 = sld [smem:[#allocation2]]
    %v1594 = vstv %s1593
    %1595 = vmatprep.subr.mxu0 0.0
    %1596 = vmatpush1.msra.mxu0 %v1577
    %1597 = vmatprep.subr.mxu0 0.0
    %1598 = vmatpush1.msra.mxu0 %v1578
    %1599 = vmatprep.subr.mxu0 0.0
    %1600 = vmatpush1.msra.mxu0 %v1579
    %1601 = vmatprep.subr.mxu0 0.0
    %1602 = vmatpush1.msra.mxu0 %v1580
    %1603 = vmatprep.subr.mxu0 0.0
    %1604 = vmatpush1.msra.mxu0 %v1581
    %1605 = vmatprep.subr.mxu0 0.0
    %1606 = vmatpush1.msra.mxu0 %v1582
    %1607 = vmatprep.subr.mxu0 0.0
    %1608 = vmatpush1.msra.mxu0 %v1583
    %1609 = vmatprep.subr.mxu0 0.0
    %1610 = vmatpush1.msra.mxu0 %v1584
    %1611 = vmatprep.subr.mxu0 0.0
    %1612 = vmatpush1.msra.mxu0 %v1585
    %1613 = vmatprep.subr.mxu0 0.0
    %1614 = vmatpush1.msra.mxu0 %v1586
    %1615 = vmatprep.subr.mxu0 0.0
    %1616 = vmatpush1.msra.mxu0 %v1587
    %1617 = vmatprep.subr.mxu0 0.0
    %1618 = vmatpush1.msra.mxu0 %v1588
    %1619 = vmatprep.subr.mxu0 0.0
    %1620 = vmatpush1.msra.mxu0 %v1589
    %1621 = vmatprep.subr.mxu0 0.0
    %1622 = vmatpush1.msra.mxu0 %v1590
    %1623 = vmatprep.subr.mxu0 0.0
    %1624 = vmatpush1.msra.mxu0 %v1591
    %1625 = vmatprep.subr.mxu0 0.0
    %1626 = vmatpush1.msra.mxu0 %v1592
    %1627 = vmatprep.subr.mxu0 0.0
    %1628 = vmatpush1.msra.mxu0 0.0
    %1629 = vmatprep.subr.mxu0 0.0
    %1630 = vmatpush1.msra.mxu0 0.0
    %1631 = vmatprep.subr.mxu0 0.0
    %1632 = vmatpush1.msra.mxu0 0.0
    %1633 = vmatprep.subr.mxu0 0.0
    %1634 = vmatpush1.msra.mxu0 0.0
    %1635 = vmatprep.subr.mxu0 0.0
    %1636 = vmatpush1.msra.mxu0 0.0
    %1637 = vmatprep.subr.mxu0 0.0
    %1638 = vmatpush1.msra.mxu0 0.0
    %1639 = vmatprep.subr.mxu0 0.0
    %1640 = vmatpush1.msra.mxu0 0.0
    %1641 = vmatprep.subr.mxu0 0.0
    %1642 = vmatpush1.msra.mxu0 0.0
    %1643 = vmatprep.subr.mxu0 0.0
    %1644 = vmatpush1.msra.mxu0 0.0
    %1645 = vmatprep.subr.mxu0 0.0
    %1646 = vmatpush1.msra.mxu0 0.0
    %1647 = vmatprep.subr.mxu0 0.0
    %1648 = vmatpush1.msra.mxu0 0.0
    %1649 = vmatprep.subr.mxu0 0.0
    %1650 = vmatpush1.msra.mxu0 0.0
    %1651 = vmatprep.subr.mxu0 0.0
    %1652 = vmatpush1.msra.mxu0 0.0
    %1653 = vmatprep.subr.mxu0 0.0
    %1654 = vmatpush1.msra.mxu0 0.0
    %1655 = vmatprep.subr.mxu0 0.0
    %1656 = vmatpush1.msra.mxu0 0.0
    %1657 = vmatprep.subr.mxu0 0.0
    %1658 = vmatpush1.msra.mxu0 0.0
    %1659 = vmatprep.mubr.f32.mxu0 0.0
    %1660 = vmatmul.mubr.f32.gmra.mrb[0].mxu0 %v1576
    %v1661 = vpop.f32.mrb[0].mxu0
    %v1662 = vadd.f32 %v1594, %v1661
    %v1663 = vpop.f32.mrb[0].mxu0
    %1664 = vdwg.mxu0
    %vm1665 = vcmask 1024
    %1666 = vst.msk [vmem:[%s6] sm:$0x3] %vm1665, %v1662
    // Predicated region
    $region30: #{lstm_forward.1} parent=1 // pred_check
      _
    $region31: #{lstm_forward.1} parent=1 // pred_check_branch
      %1668 = sbr.rel (0) target = $region33
    $region32: #{lstm_forward.1} parent=1 // pred_region
      _
    $region33: #{lstm_forward.1} parent=1 // pred_fallthru
      _
    // Predicated region
    $region34: #{lstm_forward.1} parent=1 // pred_check
      _
    $region35: #{lstm_forward.1} parent=1 // pred_check_branch
      %1670 = sbr.rel (0) target = $region37
    $region36: #{lstm_forward.1} parent=1 // pred_region
      _
    $region37: #{lstm_forward.1} parent=1 // pred_fallthru
      _
    %1671 = vsyncpa [#allocation4], 1

</llo_original>
